<compile_context>
chip_gen: v6e
topology: v6e:2x2x1
jax: 0.10.0
libtpu: 0.0.40
codegen_flags: <defaults>
</compile_context>

<pallas_src>
import jax
import jax.numpy as jnp
from jax import lax
from jax.experimental import pallas as pl
from jax.experimental.pallas import tpu as pltpu

LRELU_SLOPE = 0.2
EPS = 1e-5


def _round_up(x, m):
    return ((x + m - 1) // m) * m


def _vmem_limit_bytes():
    """Generation-aware scoped-VMEM budget (v7x has 64 MiB/TC, v5e/v6e 128 MiB)."""
    cap = 128 * 1024 * 1024
    try:
        cap = int(getattr(pltpu.get_tpu_info(), "vmem_capacity_bytes", cap))
    except Exception:
        pass
    return max(24 * 1024 * 1024, min(int(cap * 0.40), 64 * 1024 * 1024))


VMEM_LIMIT = _vmem_limit_bytes()


# ----------------------------------------------------------------------------
# Stride-2 4x4 conv layers (as 2x2 stride-1 conv on a space-to-depth input).
# One image per grid step; per-tap GEMMs read contiguous row slabs of the
# flattened s2d input so no patch matrix is ever materialized.
# ----------------------------------------------------------------------------
def _make_conv_s2d_fused_kernel(hout, wout, ws):
    """conv + bias + LeakyReLU (used for the first conv and the no-BN case)."""
    L = hout * ws
    del wout

    def kernel(x_ref, w_ref, b_ref, o_ref):
        acc = None
        for t in range(4):                      # taps of the 2x2 s2d conv
            off = (t // 2) * ws + (t % 2)       # contiguous row window
            p = jnp.dot(x_ref[off:off + L, :], w_ref[t],
                        preferred_element_type=jnp.float32)
            acc = p if acc is None else acc + p
        acc = acc + b_ref[...]
        acc = jnp.where(acc >= 0, acc, LRELU_SLOPE * acc)
        o_ref[...] = acc.astype(o_ref.dtype)

    return kernel


def _make_conv_s2d_stats_kernel(hout, wout, ws):
    """conv (no bias) emitting raw z + numerically-shifted BN statistics."""
    L = hout * ws
    inv_cnt = 1.0 / float(hout * wout)

    def kernel(x_ref, w_ref, m_ref, z_ref, s1_ref, s2_ref, r_ref):
        i = pl.program_id(0)
        acc = None
        for t in range(4):
            off = (t // 2) * ws + (t % 2)
            p = jnp.dot(x_ref[off:off + L, :], w_ref[t],
                        preferred_element_type=jnp.float32)
            acc = p if acc is None else acc + p
        zb = acc.astype(z_ref.dtype)            # bf16-rounded values that the
        z_ref[...] = zb                         # consumer will normalize
        zf = zb.astype(jnp.float32)
        msk = m_ref[...]                        # (L, 1) {0,1}: masks junk cols
        zm = zf * msk

        @pl.when(i == 0)
        def _():
            # per-channel reference mean (image 0) for shifted variance sums
            r_ref[...] = jnp.sum(zm, axis=0, keepdims=True) * inv_cnt
            s1_ref[...] = jnp.zeros_like(s1_ref)
            s2_ref[...] = jnp.zeros_like(s2_ref)

        d = (zf - r_ref[...]) * msk
        s1_ref[...] = s1_ref[...] + jnp.sum(zm, axis=0, keepdims=True)
        s2_ref[...] = s2_ref[...] + jnp.sum(d * d, axis=0, keepdims=True)

    return kernel


def _prep_s2d_input(a_nhwc):
    """pad=1, space-to-depth(2), flatten rows.  One fused XLA copy per layer."""
    n, h, w, c = a_nhwc.shape
    assert h % 2 == 0 and w % 2 == 0, "stride-2 conv layers expect even spatial dims"
    hout, wout = h // 2, w // 2
    hs, ws = hout + 1, wout + 1
    xp = jnp.pad(a_nhwc, ((0, 0), (1, 1), (1, 1), (0, 0)))
    x = xp.reshape(n, hs, 2, ws, 2, c).transpose(0, 1, 3, 2, 4, 5)
    x = x.reshape(n, hs * ws, 4 * c)
    rows = _round_up(hs * ws + 1, 8)            # +1: tap (1,1) reads one extra row
    x = jnp.pad(x, ((0, 0), (0, rows - hs * ws), (0, 0))).astype(jnp.bfloat16)
    return x, hout, wout, ws, rows


def _prep_s2d_weight(w, cout_p):
    """(Cout,Cin,4,4) -> (4 taps, 4*Cin, Cout_p) matching the s2d channel order."""
    cout, cin, kh, kw = w.shape
    assert kh == 4 and kw == 4
    wt = jnp.transpose(w, (2, 3, 1, 0))                  # (ky, kx, cin, cout)
    wt = wt.reshape(2, 2, 2, 2, cin, cout)               # (a, dy, b, dx, cin, cout)
    wt = wt.transpose(0, 2, 1, 3, 4, 5)                  # (a, b, dy, dx, cin, cout)
    wt = wt.reshape(4, 4 * cin, cout)
    wt = jnp.pad(wt, ((0, 0), (0, 0), (0, cout_p - cout)))
    return wt.astype(jnp.bfloat16)


def conv_down_fused(a_nhwc, w, b):
    """4x4 stride-2 pad-1 conv + bias + LeakyReLU.  Returns (z, geom)."""
    n = a_nhwc.shape[0]
    cout = w.shape[0]
    cout_p = _round_up(cout, 128)
    xf, hout, wout, ws, rows = _prep_s2d_input(a_nhwc)
    c4 = xf.shape[-1]
    L = hout * ws
    wk = _prep_s2d_weight(w, cout_p)
    bp = jnp.pad(b, (0, cout_p - cout)).reshape(1, cout_p).astype(jnp.float32)

    cost = pl.CostEstimate(
        flops=2 * n * L * (4 * c4) * cout_p,
        transcendentals=0,
        bytes_accessed=n * rows * c4 * 2 + 4 * c4 * cout_p * 2 + n * L * cout_p * 2)

    z = pl.pallas_call(
        _make_conv_s2d_fused_kernel(hout, wout, ws),
        grid=(n,),
        in_specs=[pl.BlockSpec((None, rows, c4), lambda i: (i, 0, 0)),
                  pl.BlockSpec((4, c4, cout_p), lambda i: (0, 0, 0)),
                  pl.BlockSpec((1, cout_p), lambda i: (0, 0))],
        out_specs=pl.BlockSpec((None, L, cout_p), lambda i: (i, 0, 0)),
        out_shape=jax.ShapeDtypeStruct((n, L, cout_p), jnp.bfloat16),
        compiler_params=pltpu.CompilerParams(
            dimension_semantics=("parallel",),
            vmem_limit_bytes=VMEM_LIMIT),
        cost_estimate=cost,
    )(xf, wk, bp)
    return z, (hout, wout, ws, cout)


def conv_down_stats(a_nhwc, w):
    """4x4 stride-2 pad-1 conv (no bias) + BN batch statistics."""
    n = a_nhwc.shape[0]
    cout = w.shape[0]
    cout_p = _round_up(cout, 128)
    xf, hout, wout, ws, rows = _prep_s2d_input(a_nhwc)
    c4 = xf.shape[-1]
    L = hout * ws
    wk = _prep_s2d_weight(w, cout_p)
    # mask of valid (non-junk) output rows: row q*ws + t is valid iff t < wout
    mask = ((jnp.arange(L) % ws) < wout).astype(jnp.float32).reshape(L, 1)

    cost = pl.CostEstimate(
        flops=2 * n * L * (4 * c4) * cout_p,
        transcendentals=0,
        bytes_accessed=n * rows * c4 * 2 + 4 * c4 * cout_p * 2 + n * L * cout_p * 2)

    z, s1, s2, r = pl.pallas_call(
        _make_conv_s2d_stats_kernel(hout, wout, ws),
        grid=(n,),
        in_specs=[pl.BlockSpec((None, rows, c4), lambda i: (i, 0, 0)),
                  pl.BlockSpec((4, c4, cout_p), lambda i: (0, 0, 0)),
                  pl.BlockSpec((L, 1), lambda i: (0, 0))],
        out_specs=(pl.BlockSpec((None, L, cout_p), lambda i: (i, 0, 0)),
                   pl.BlockSpec((1, cout_p), lambda i: (0, 0)),
                   pl.BlockSpec((1, cout_p), lambda i: (0, 0)),
                   pl.BlockSpec((1, cout_p), lambda i: (0, 0))),
        out_shape=(jax.ShapeDtypeStruct((n, L, cout_p), jnp.bfloat16),
                   jax.ShapeDtypeStruct((1, cout_p), jnp.float32),
                   jax.ShapeDtypeStruct((1, cout_p), jnp.float32),
                   jax.ShapeDtypeStruct((1, cout_p), jnp.float32)),
        compiler_params=pltpu.CompilerParams(
            dimension_semantics=("arbitrary",),   # sequential stats accumulation
            vmem_limit_bytes=VMEM_LIMIT),
        cost_estimate=cost,
    )(xf, wk, mask)
    return z, s1, s2, r, (hout, wout, ws, cout)


def _unflatten(z, n, hout, wout, ws, cout, *, scale=None, shift=None, leaky=False):
    """Strip junk columns / padding and (optionally) fold BN + LeakyReLU into the
    consumer's input-prep copy.  Fuses with the next layer's pad/s2d in XLA."""
    a = z.astype(jnp.float32).reshape(n, hout, ws, -1)[:, :, :wout, :cout]
    if scale is not None:
        a = a * scale + shift
    if leaky:
        a = jnp.where(a >= 0, a, LRELU_SLOPE * a)
    return a                                     # (n, hout, wout, cout) f32


# ----------------------------------------------------------------------------
# Final 4x4 valid conv (spatial == kernel -> 1x1 output) + sigmoid
# ----------------------------------------------------------------------------
def _final_conv_kernel(x_ref, w_ref, b_ref, o_ref):
    z = jnp.dot(x_ref[...], w_ref[...], preferred_element_type=jnp.float32)
    z = z + b_ref[...]
    o_ref[...] = jax.nn.sigmoid(z).astype(o_ref.dtype)


def final_conv(a_nhwc, w, b):
    n, h, wdt, cin = a_nhwc.shape
    cout, _, kh, kw = w.shape
    assert h == kh and wdt == kw, "final conv expects spatial == kernel (1x1 out)"
    cout_p = _round_up(cout, 128)
    kf = kh * kw * cin
    np_ = _round_up(max(n, 8), 8)
    x = a_nhwc.reshape(n, kf)
    x = jnp.pad(x, ((0, np_ - n), (0, 0))).astype(jnp.bfloat16)
    wk = jnp.transpose(w, (2, 3, 1, 0)).reshape(kf, cout)
    wk = jnp.pad(wk, ((0, 0), (0, cout_p - cout))).astype(jnp.bfloat16)
    bp = jnp.pad(b, (0, cout_p - cout)).reshape(1, cout_p).astype(jnp.float32)
    vmem = pl.BlockSpec(memory_space=pltpu.MemorySpace.VMEM)
    out = pl.pallas_call(
        _final_conv_kernel,
        out_shape=jax.ShapeDtypeStruct((np_, cout_p), jnp.float32),
        in_specs=[vmem, vmem, vmem],
        out_specs=vmem,
        compiler_params=pltpu.CompilerParams(vmem_limit_bytes=VMEM_LIMIT),
    )(x, wk, bp)
    return out[:n, :cout]


# ----------------------------------------------------------------------------
# Fused MLP kernel: [Linear -> LayerNorm -> LeakyReLU] * n_hidden -> Linear
# ----------------------------------------------------------------------------
def make_mlp_kernel(n_hidden, use_ln, use_sigmoid):
    def kernel(*refs):
        x_ref, o_ref = refs[0], refs[-1]
        h = x_ref[...].astype(jnp.float32)
        idx = 1
        for _ in range(n_hidden):
            w_ref, b_ref, g_ref, bt_ref = refs[idx:idx + 4]
            idx += 4
            h = jnp.dot(h.astype(jnp.bfloat16), w_ref[...],
                        preferred_element_type=jnp.float32) + b_ref[...]
            if use_ln:
                mu = jnp.mean(h, axis=-1, keepdims=True)
                var = jnp.mean((h - mu) ** 2, axis=-1, keepdims=True)
                h = (h - mu) * jax.lax.rsqrt(var + EPS) * g_ref[...] + bt_ref[...]
            h = jnp.where(h >= 0, h, LRELU_SLOPE * h)
        w_ref, b_ref = refs[idx], refs[idx + 1]
        out = jnp.dot(h.astype(jnp.bfloat16), w_ref[...],
                      preferred_element_type=jnp.float32) + b_ref[...]
        if use_sigmoid:
            out = jax.nn.sigmoid(out)
        o_ref[...] = out.astype(o_ref.dtype)
    return kernel


def mlp_forward(x, hidden_params, w_out, b_out, *, use_ln, use_sigmoid):
    batch = x.shape[0]
    bp = _round_up(max(batch, 16), 16)
    o_size = w_out.shape[1]
    o_p = _round_up(o_size, 128)                 # lane-dense final store
    xpad = jnp.pad(x, ((0, bp - batch), (0, 0))).astype(jnp.bfloat16)
    args = [xpad]
    for (w, b, g, bt) in hidden_params:
        args += [w.astype(jnp.bfloat16),
                 b.reshape(1, -1).astype(jnp.float32),
                 g.reshape(1, -1).astype(jnp.float32),
                 bt.reshape(1, -1).astype(jnp.float32)]
    w_out_p = jnp.pad(w_out, ((0, 0), (0, o_p - o_size))).astype(jnp.bfloat16)
    b_out_p = jnp.pad(b_out, (0, o_p - o_size)).reshape(1, o_p).astype(jnp.float32)
    args += [w_out_p, b_out_p]
    vmem = pl.BlockSpec(memory_space=pltpu.MemorySpace.VMEM)
    out = pl.pallas_call(
        make_mlp_kernel(len(hidden_params), use_ln, use_sigmoid),
        out_shape=jax.ShapeDtypeStruct((bp, o_p), jnp.float32),
        in_specs=[vmem] * len(args),
        out_specs=vmem,
        compiler_params=pltpu.CompilerParams(vmem_limit_bytes=VMEM_LIMIT),
    )(*args)
    return out[:batch, :o_size]


# ----------------------------------------------------------------------------
# CNN module (parameters initialized deterministically in-script)
# ----------------------------------------------------------------------------
class CNNPallas:
    def __init__(self, key, real_size, img_channels, img_out_size, o_size,
                 feature_maps=64, h_size=128, h_layers=3,
                 use_sigmoid=False, use_batch_norm=True):
        self.real_pa = sorted(real_size)
        self.img_pa = sorted(img_channels)
        self.use_sigmoid = use_sigmoid
        self.use_batch_norm = use_batch_norm
        total_channels = sum(img_channels[k] for k in img_channels)
        total_size = sum(real_size[k] for k in real_size) + img_out_size

        keys = iter(jax.random.split(key, 64))

        def conv_w(cout, cin):
            return 0.02 * jax.random.normal(next(keys), (cout, cin, 4, 4), jnp.float32)

        def conv_b(cout, cin):
            bound = 1.0 / (cin * 16) ** 0.5
            return jax.random.uniform(next(keys), (cout,), jnp.float32, -bound, bound)

        def bn_params(c):
            g = 1.0 + 0.02 * jax.random.normal(next(keys), (c,), jnp.float32)
            return g, jnp.zeros((c,), jnp.float32)

        self.conv_layers = []
        # First conv: bias + LeakyReLU, never BN.
        self.conv_layers.append(dict(
            w=conv_w(feature_maps, total_channels),
            b=conv_b(feature_maps, total_channels),
            g=None, bt=None, use_bn=False))
        for h in range(h_layers):
            cin, cout = 2 ** h * feature_maps, 2 ** (h + 1) * feature_maps
            w = conv_w(cout, cin)
            if use_batch_norm:
                g, bt = bn_params(cout)
                b = jnp.zeros((cout,), jnp.float32)   # reference: bias=False with BN
            else:
                g, bt = None, None
                b = conv_b(cout, cin)
            self.conv_layers.append(dict(w=w, b=b, g=g, bt=bt, use_bn=use_batch_norm))
        cin = 2 ** h_layers * feature_maps
        self.conv_layers.append(dict(
            w=conv_w(img_out_size, cin), b=conv_b(img_out_size, cin),
            g=None, bt=None, use_bn=False))

        def linear(fan_in, fan_out):
            # xavier_normal_ with gain = calculate_gain('relu') = sqrt(2)
            std = (2.0 ** 0.5) * (2.0 / (fan_in + fan_out)) ** 0.5
            w = std * jax.random.normal(next(keys), (fan_in, fan_out), jnp.float32)
            bound = 1.0 / fan_in ** 0.5
            b = jax.random.uniform(next(keys), (fan_out,), jnp.float32, -bound, bound)
            return w, b

        self.mlp_hidden = []
        w, b = linear(total_size, h_size)
        self.mlp_hidden.append((w, b, jnp.ones((h_size,), jnp.float32),
                                jnp.zeros((h_size,), jnp.float32)))
        for _ in range(h_layers - 1):
            w, b = linear(h_size, h_size)
            self.mlp_hidden.append((w, b, jnp.ones((h_size,), jnp.float32),
                                    jnp.zeros((h_size,), jnp.float32)))
        self.w_out, self.b_out = linear(h_size, o_size)

    def forward(self, real_pa, img_pa, include_inp=False):
        # Inputs are PyTorch-convention NCHW; concat on channel axis.
        img_inp = jnp.concatenate([img_pa[k] for k in self.img_pa], axis=1)
        a = jnp.transpose(img_inp, (0, 2, 3, 1)).astype(jnp.float32)  # NHWC
        n = a.shape[0]

        # --- conv stack ---------------------------------------------------
        lyr0 = self.conv_layers[0]
        z, geom = conv_down_fused(a, lyr0["w"], lyr0["b"])
        scale = shift = None
        leaky_pending = False      # first layer's kernel already applied LeakyReLU

        for lyr in self.conv_layers[1:-1]:
            a = _unflatten(z, n, *geom, scale=scale, shift=shift, leaky=leaky_pending)
            if lyr["use_bn"]:
                z, s1, s2, r, geom = conv_down_stats(a, lyr["w"])
                hout, wout, _, cout = geom
                m_total = float(n * hout * wout)
                mean = s1[0, :cout] / m_total
                var = jnp.maximum(s2[0, :cout] / m_total
                                  - (mean - r[0, :cout]) ** 2, 0.0)
                scale = lyr["g"] * jax.lax.rsqrt(var + EPS)
                shift = lyr["bt"] - mean * scale
                leaky_pending = True                    # applied by the consumer
            else:
                z, geom = conv_down_fused(a, lyr["w"], lyr["b"])
                scale = shift = None
                leaky_pending = False

        lyr_last = self.conv_layers[-1]
        a = _unflatten(z, n, *geom, scale=scale, shift=shift, leaky=leaky_pending)
        conv_out = final_conv(a, lyr_last["w"], lyr_last["b"])   # (n, img_out_size)

        # --- MLP head -------------------------------------------------------
        real_inp = None
        feat = conv_out
        if len(self.real_pa) > 0:
            real_inp = jnp.concatenate([real_pa[k] for k in self.real_pa], axis=1)
            feat = jnp.concatenate([conv_out, real_inp], axis=1)
        out = mlp_forward(feat, self.mlp_hidden, self.w_out, self.b_out,
                          use_ln=self.use_batch_norm, use_sigmoid=self.use_sigmoid)
        if include_inp:
            return out, img_inp, real_inp
        return out


if __name__ == "__main__":
    key = jax.random.PRNGKey(0)
    k_model, k_a, k_b, k_u, k_v = jax.random.split(key, 5)

    # Small config: total_channels=4, spatial 32 -> 16 -> 8 -> 4 -> (4x4 valid) 1
    real_size = {"u": 3, "v": 2}
    img_channels = {"imgA": 2, "imgB": 2}
    model = CNNPallas(k_model, real_size, img_channels,
                      img_out_size=6, o_size=5,
                      feature_maps=8, h_size=32, h_layers=2,
                      use_sigmoid=False, use_batch_norm=True)

    img_pa = {
        "imgA": jax.random.normal(k_a, (2, 2, 32, 32), jnp.float32),
        "imgB": jax.random.normal(k_b, (2, 2, 32, 32), jnp.float32),
    }
    real_pa = {
        "u": jax.random.normal(k_u, (2, 3), jnp.float32),
        "v": jax.random.normal(k_v, (2, 2), jnp.float32),
    }

    out = model.forward(real_pa, img_pa)
    out = jax.block_until_ready(out)
    assert out.shape == (2, 5), out.shape
    assert bool(jnp.all(jnp.isfinite(out)))
    print("KERNEL_OK")
</pallas_src>

<mosaic_0001>
module attributes {stable_mosaic.version = 11 : i64} {
  func.func @kernel(%arg0: i32, %arg1: memref<1x296x16xbf16, #tpu.memory_space<vmem>>, %arg2: memref<4x16x128xbf16, #tpu.memory_space<vmem>>, %arg3: memref<1x128xf32, #tpu.memory_space<vmem>>, %arg4: memref<1x272x128xbf16, #tpu.memory_space<vmem>>) attributes {dimension_semantics = [#tpu.dimension_semantics<parallel>], iteration_bounds = array<i64: 2>, scalar_prefetch = 0 : i64, scratch_operands = 0 : i64, tpu.core_type = #tpu.core_type<tc>, window_params = [{transform_indices = @transform_0, window_bounds = array<i64: 1, 296, 16>}, {pipeline_mode = #tpu.pipeline_mode<synchronous>, transform_indices = @transform_1, window_bounds = array<i64: 4, 16, 128>}, {pipeline_mode = #tpu.pipeline_mode<synchronous>, transform_indices = @transform_2, window_bounds = array<i64: 1, 128>}, {transform_indices = @transform_3, window_bounds = array<i64: 1, 272, 128>}]} {
    %c0 = arith.constant 0 : index
    %c0_0 = arith.constant 0 : index
    %c0_1 = arith.constant 0 : index
    %0 = vector.load %arg1[%c0, %c0_0, %c0_1] : memref<1x296x16xbf16, #tpu.memory_space<vmem>>, vector<1x272x16xbf16>
    %1 = vector.shape_cast %0 : vector<1x272x16xbf16> to vector<272x16xbf16>
    %c0_2 = arith.constant 0 : index
    %c0_3 = arith.constant 0 : index
    %c0_4 = arith.constant 0 : index
    %2 = vector.load %arg2[%c0_2, %c0_3, %c0_4] : memref<4x16x128xbf16, #tpu.memory_space<vmem>>, vector<1x16x128xbf16>
    %3 = vector.shape_cast %2 : vector<1x16x128xbf16> to vector<16x128xbf16>
    %cst = arith.constant dense<0.000000e+00> : vector<272x128xf32>
    %4 = tpu.matmul %1, %3, %cst {dimension_numbers = #tpu.dot_dimension_numbers<[1], [0], [0], [1], [0, 0, 1, 1], [], []>} : vector<272x16xbf16>, vector<16x128xbf16>, vector<272x128xf32> -> vector<272x128xf32>
    %c0_5 = arith.constant 0 : index
    %c1 = arith.constant 1 : index
    %c0_6 = arith.constant 0 : index
    %5 = vector.load %arg1[%c0_5, %c1, %c0_6] : memref<1x296x16xbf16, #tpu.memory_space<vmem>>, vector<1x272x16xbf16>
    %6 = vector.shape_cast %5 : vector<1x272x16xbf16> to vector<272x16xbf16>
    %c1_7 = arith.constant 1 : index
    %c0_8 = arith.constant 0 : index
    %c0_9 = arith.constant 0 : index
    %7 = vector.load %arg2[%c1_7, %c0_8, %c0_9] : memref<4x16x128xbf16, #tpu.memory_space<vmem>>, vector<1x16x128xbf16>
    %8 = vector.shape_cast %7 : vector<1x16x128xbf16> to vector<16x128xbf16>
    %cst_10 = arith.constant dense<0.000000e+00> : vector<272x128xf32>
    %9 = tpu.matmul %6, %8, %cst_10 {dimension_numbers = #tpu.dot_dimension_numbers<[1], [0], [0], [1], [0, 0, 1, 1], [], []>} : vector<272x16xbf16>, vector<16x128xbf16>, vector<272x128xf32> -> vector<272x128xf32>
    %10 = arith.addf %4, %9 : vector<272x128xf32>
    %c0_11 = arith.constant 0 : index
    %c17 = arith.constant 17 : index
    %c0_12 = arith.constant 0 : index
    %11 = vector.load %arg1[%c0_11, %c17, %c0_12] : memref<1x296x16xbf16, #tpu.memory_space<vmem>>, vector<1x272x16xbf16>
    %12 = vector.shape_cast %11 : vector<1x272x16xbf16> to vector<272x16xbf16>
    %c2 = arith.constant 2 : index
    %c0_13 = arith.constant 0 : index
    %c0_14 = arith.constant 0 : index
    %13 = vector.load %arg2[%c2, %c0_13, %c0_14] : memref<4x16x128xbf16, #tpu.memory_space<vmem>>, vector<1x16x128xbf16>
    %14 = vector.shape_cast %13 : vector<1x16x128xbf16> to vector<16x128xbf16>
    %cst_15 = arith.constant dense<0.000000e+00> : vector<272x128xf32>
    %15 = tpu.matmul %12, %14, %cst_15 {dimension_numbers = #tpu.dot_dimension_numbers<[1], [0], [0], [1], [0, 0, 1, 1], [], []>} : vector<272x16xbf16>, vector<16x128xbf16>, vector<272x128xf32> -> vector<272x128xf32>
    %16 = arith.addf %10, %15 : vector<272x128xf32>
    %c0_16 = arith.constant 0 : index
    %c18 = arith.constant 18 : index
    %c0_17 = arith.constant 0 : index
    %17 = vector.load %arg1[%c0_16, %c18, %c0_17] : memref<1x296x16xbf16, #tpu.memory_space<vmem>>, vector<1x272x16xbf16>
    %18 = vector.shape_cast %17 : vector<1x272x16xbf16> to vector<272x16xbf16>
    %c3 = arith.constant 3 : index
    %c0_18 = arith.constant 0 : index
    %c0_19 = arith.constant 0 : index
    %19 = vector.load %arg2[%c3, %c0_18, %c0_19] : memref<4x16x128xbf16, #tpu.memory_space<vmem>>, vector<1x16x128xbf16>
    %20 = vector.shape_cast %19 : vector<1x16x128xbf16> to vector<16x128xbf16>
    %cst_20 = arith.constant dense<0.000000e+00> : vector<272x128xf32>
    %21 = tpu.matmul %18, %20, %cst_20 {dimension_numbers = #tpu.dot_dimension_numbers<[1], [0], [0], [1], [0, 0, 1, 1], [], []>} : vector<272x16xbf16>, vector<16x128xbf16>, vector<272x128xf32> -> vector<272x128xf32>
    %22 = arith.addf %16, %21 : vector<272x128xf32>
    %c0_21 = arith.constant 0 : index
    %c0_22 = arith.constant 0 : index
    %23 = vector.load %arg3[%c0_21, %c0_22] : memref<1x128xf32, #tpu.memory_space<vmem>>, vector<1x128xf32>
    %24 = vector.broadcast %23 : vector<1x128xf32> to vector<272x128xf32>
    %25 = arith.addf %22, %24 : vector<272x128xf32>
    %cst_23 = arith.constant 0.000000e+00 : f32
    %26 = vector.broadcast %cst_23 : f32 to vector<272x128xf32>
    %27 = arith.cmpf oge, %25, %26 : vector<272x128xf32>
    %cst_24 = arith.constant 2.000000e-01 : f32
    %28 = vector.broadcast %cst_24 : f32 to vector<272x128xf32>
    %29 = arith.mulf %28, %25 : vector<272x128xf32>
    %30 = arith.select %27, %25, %29 : vector<272x128xi1>, vector<272x128xf32>
    %31 = arith.truncf %30 : vector<272x128xf32> to vector<272x128xbf16>
    %c0_25 = arith.constant 0 : index
    %c0_26 = arith.constant 0 : index
    %c0_27 = arith.constant 0 : index
    %32 = vector.load %arg4[%c0_25, %c0_26, %c0_27] : memref<1x272x128xbf16, #tpu.memory_space<vmem>>, vector<1x272x128xbf16>
    %33 = vector.shape_cast %32 : vector<1x272x128xbf16> to vector<272x128xbf16>
    %34 = vector.shape_cast %31 : vector<272x128xbf16> to vector<1x272x128xbf16>
    tpu.vector_store %arg4[%c0_25, %c0_26, %c0_27], %34 {strides = array<i32>} : memref<1x272x128xbf16, #tpu.memory_space<vmem>>, vector<1x272x128xbf16>,
    return
  }
  func.func @transform_0(%arg0: i32) -> (i32, i32, i32) {
    %c0_i32 = arith.constant 0 : i32
    %c0_i32_0 = arith.constant 0 : i32
    %c0_i32_1 = arith.constant 0 : i32
    return %arg0, %c0_i32, %c0_i32_0 : i32, i32, i32
  }
  func.func @transform_1(%arg0: i32) -> (i32, i32, i32) {
    %c0_i32 = arith.constant 0 : i32
    %c0_i32_0 = arith.constant 0 : i32
    %c0_i32_1 = arith.constant 0 : i32
    %c0_i32_2 = arith.constant 0 : i32
    return %c0_i32, %c0_i32_0, %c0_i32_1 : i32, i32, i32
  }
  func.func @transform_2(%arg0: i32) -> (i32, i32) {
    %c0_i32 = arith.constant 0 : i32
    %c0_i32_0 = arith.constant 0 : i32
    %c0_i32_1 = arith.constant 0 : i32
    return %c0_i32, %c0_i32_0 : i32, i32
  }
  func.func @transform_3(%arg0: i32) -> (i32, i32, i32) {
    %c0_i32 = arith.constant 0 : i32
    %c0_i32_0 = arith.constant 0 : i32
    %c0_i32_1 = arith.constant 0 : i32
    return %arg0, %c0_i32, %c0_i32_0 : i32, i32, i32
  }
}

</mosaic_0001>

<llo_original>
// kernel: tpu_custom_call.1
$region0: #{tpu_custom_call.1}
  #allocation0 [shape = 'u32[]', space=smem, size = 0x4, offset = 0x4, fixed_abs, tag = 'smem constant byte address 0x4 - core index']
  #allocation1 [shape = 'u32[144,128]{1,0:T(1,128)}', space=vmem, size = 0x12000, scoped, tag = 'internal scratch']
  %s0 = inlined_call_operand.vmem [shape: bf16[2,296,16], index: 0, kind: input, shape index: {}]
  %s1 = inlined_call_operand.vmem [shape: bf16[4,16,128], index: 1, kind: input, shape index: {}]
  %s2 = inlined_call_operand.vmem [shape: f32[1,128], index: 2, kind: input, shape index: {}]
  %s3 = inlined_call_operand.hbm [shape: bf16[2,272,128], index: 3, kind: output, shape index: {}]
  %s4 = sld [smem:[#allocation0]]
  $region45: #{tpu_custom_call.1} parent=0
    _
  %s6 = ssub.s32 1, %s4
  %s7 = scalar_select 0, %s6, %s4
  $region1: #{tpu_custom_call.1} parent=0
    #allocation2 [shape = 'u8[139264]{0}', space=vmem, size = 0x22000, scoped, tag = 'output window, operand 0']
    #allocation3 [shape = 's32[2]{0}', space=sflag, size = 0x8, scoped, tag = 'scoped memory for tpu_custom_call.1']
    %8 = vsyncpa [#allocation3], 0
    %s9 = scalar_lea.sflag [#allocation3], 1
    %10 = vsyncpa %s9, 0
    loop: start=0, step=1, limit=4
    $region2: #{tpu_custom_call.1} parent=1 // loop_pre_header
      _
    $region3: #{tpu_custom_call.1} parent=1 // loop_header
      %s12 = sphi 0, %s16
      %p13 = scmp.ge.s32.totalorder %s12, 4
      %s22 = sphi 0, %s24
      %s25 = sphi 0, %s22
      %s26 = sphi 0, %s25
      %s42 = sphi 0, %s26
      %s46 = sphi 0, %s46
      %s48 = sphi 0, %s46
      %s49 = sphi 0, %s48
      %s63 = sphi 0, %s49
      %s67 = sphi 0, %s67
      %s69 = sphi 0, %s67
      %s70 = sphi 0, %s69
      %s84 = sphi 0, %s70
      %s90 = sphi 0, %s92
      %s93 = sphi 0, %s90
      %s94 = sphi 0, %s93
      %s110 = sphi 0, %s94
    $region4: #{tpu_custom_call.1} parent=1 // loop_header_branch
      %15 = sbr.rel (%p13) target = $region8
    $region5: #{tpu_custom_call.1} parent=1 // loop_body
      %s17 = ssub.s32 %s12, 1
      %s18 = ssub.s32 %s12, 2
      %s19 = sadd.s32 %s12, 1
      %s20 = ssub.s32 %s12, %s19
      %p21 = scmp.eq.s32.totalorder %s20, 0
      %s23 = sadd.s32 %s22, 1
      %s24 = scalar_select %p21, %s22, %s23
      %p27 = pneg %p21
      %p28 = scmp.eq.s32.totalorder %s12, 1
      %p29 = por %p27, %p28
      %p30 = scmp.ne.s32.totalorder %s22, %s25
      %p31 = scmp.eq.s32.totalorder %s12, 0
      %p32 = por %p30, %p31
      %p33 = scmp.ne.s32.totalorder %s22, %s25
      %p34 = scmp.eq.s32.totalorder %s17, 1
      %p35 = por %p33, %p34
      %p36 = scmp.ne.s32.totalorder %s25, %s26
      %p37 = scmp.eq.s32.totalorder %s17, 0
      %p38 = por %p36, %p37
      %p39 = scmp.ne.s32.totalorder %s25, %s26
      %p40 = scmp.eq.s32.totalorder %s18, 1
      %p41 = por %p39, %p40
      %p43 = scmp.ne.s32.totalorder %s26, %s42
      %p44 = scmp.eq.s32.totalorder %s18, 0
      %p45 = por %p43, %p44
      %s47 = sadd.s32 %s46, 1
      %p50 = scmp.eq.s32.totalorder %s12, 1
      %p51 = scmp.ne.s32.totalorder %s46, %s48
      %p52 = scmp.eq.s32.totalorder %s12, 0
      %p53 = por %p51, %p52
      %p54 = scmp.ne.s32.totalorder %s46, %s48
      %p55 = scmp.eq.s32.totalorder %s17, 1
      %p56 = por %p54, %p55
      %p57 = scmp.ne.s32.totalorder %s48, %s49
      %p58 = scmp.eq.s32.totalorder %s17, 0
      %p59 = por %p57, %p58
      %p60 = scmp.ne.s32.totalorder %s48, %s49
      %p61 = scmp.eq.s32.totalorder %s18, 1
      %p62 = por %p60, %p61
      %p64 = scmp.ne.s32.totalorder %s49, %s63
      %p65 = scmp.eq.s32.totalorder %s18, 0
      %p66 = por %p64, %p65
      %s68 = sadd.s32 %s67, 1
      %p71 = scmp.eq.s32.totalorder %s12, 1
      %p72 = scmp.ne.s32.totalorder %s67, %s69
      %p73 = scmp.eq.s32.totalorder %s12, 0
      %p74 = por %p72, %p73
      %p75 = scmp.ne.s32.totalorder %s67, %s69
      %p76 = scmp.eq.s32.totalorder %s17, 1
      %p77 = por %p75, %p76
      %p78 = scmp.ne.s32.totalorder %s69, %s70
      %p79 = scmp.eq.s32.totalorder %s17, 0
      %p80 = por %p78, %p79
      %p81 = scmp.ne.s32.totalorder %s69, %s70
      %p82 = scmp.eq.s32.totalorder %s18, 1
      %p83 = por %p81, %p82
      %p85 = scmp.ne.s32.totalorder %s70, %s84
      %p86 = scmp.eq.s32.totalorder %s18, 0
      %p87 = por %p85, %p86
      %s88 = ssub.s32 %s12, %s19
      %p89 = scmp.eq.s32.totalorder %s88, 0
      %s91 = sadd.s32 %s90, 1
      %s92 = scalar_select %p89, %s90, %s91
      %p95 = pneg %p89
      %p96 = scmp.eq.s32.totalorder %s12, 1
      %p97 = por %p95, %p96
      %p98 = scmp.ne.s32.totalorder %s90, %s93
      %p99 = scmp.eq.s32.totalorder %s12, 0
      %p100 = por %p98, %p99
      %p101 = scmp.ne.s32.totalorder %s90, %s93
      %p102 = scmp.eq.s32.totalorder %s17, 1
      %p103 = por %p101, %p102
      %p104 = scmp.ne.s32.totalorder %s93, %s94
      %p105 = scmp.eq.s32.totalorder %s17, 0
      %p106 = por %p104, %p105
      %p107 = scmp.ne.s32.totalorder %s93, %s94
      %p108 = scmp.eq.s32.totalorder %s18, 1
      %p109 = por %p107, %p108
      %p111 = scmp.ne.s32.totalorder %s94, %s110
      %p112 = scmp.eq.s32.totalorder %s18, 0
      %p113 = por %p111, %p112
      %p114 = scmp.le.s32.totalorder 1, %s12
      %p115 = scmp.lt.s32.totalorder %s12, 3
      %p116 = pnand %p114, %p115
      %p117 = pneg %p116
      // Predicated region
      $region9: #{tpu_custom_call.1} parent=5 // pred_check
        _
      $region10: #{tpu_custom_call.1} parent=5 // pred_check_branch
        %119 = sbr.rel (%p116) target = $region12
      $region11: #{tpu_custom_call.1} parent=5 // pred_region
        %s120 = ssub.s32 %s12, 1
        // Predicated region
        $region13: #{tpu_custom_call.1} parent=11 // pred_check
          %p121 = pneg %p59
        $region14: #{tpu_custom_call.1} parent=11 // pred_check_branch
          %123 = sbr.rel (%p121) target = $region16
        $region15: #{tpu_custom_call.1} parent=11 // pred_region
          _
        $region16: #{tpu_custom_call.1} parent=11 // pred_fallthru
          _
        // Predicated region
        $region17: #{tpu_custom_call.1} parent=11 // pred_check
          %p124 = pneg %p80
        $region18: #{tpu_custom_call.1} parent=11 // pred_check_branch
          %126 = sbr.rel (%p124) target = $region20
        $region19: #{tpu_custom_call.1} parent=11 // pred_region
          _
        $region20: #{tpu_custom_call.1} parent=11 // pred_fallthru
          _
      $region12: #{tpu_custom_call.1} parent=5 // pred_fallthru
        _
      %p127 = scmp.lt.s32.totalorder %s12, 2
      // Predicated region
      $region21: #{tpu_custom_call.1} parent=5 // pred_check
        %p128 = pneg %p127
      $region22: #{tpu_custom_call.1} parent=5 // pred_check_branch
        %130 = sbr.rel (%p128) target = $region24
      $region23: #{tpu_custom_call.1} parent=5 // pred_region
        // Predicated region
        $region25: #{tpu_custom_call.1} parent=23 // pred_check
          %p131 = pneg %p32
        $region26: #{tpu_custom_call.1} parent=23 // pred_check_branch
          %133 = sbr.rel (%p131) target = $region28
        $region27: #{tpu_custom_call.1} parent=23 // pred_region
          %p134 = scmp.lt.s32.totalorder %s12, 1
          %s135 = scalar_select %p134, %s12, 1
          %s136 = smul.addr %s135, 37
          %s137 = smul.addr %s136, 4
          %s138 = scalar_lea.vmem %s0, %s137
        $region28: #{tpu_custom_call.1} parent=23 // pred_fallthru
          _
      $region24: #{tpu_custom_call.1} parent=5 // pred_fallthru
        _
      %p139 = scmp.le.s32.totalorder 1, %s12
      %p140 = scmp.lt.s32.totalorder %s12, 3
      %p141 = pnand %p139, %p140
      %p142 = pneg %p141
      // Predicated region
      $region29: #{tpu_custom_call.1} parent=5 // pred_check
        _
      $region30: #{tpu_custom_call.1} parent=5 // pred_check_branch
        %144 = sbr.rel (%p141) target = $region32
      $region31: #{tpu_custom_call.1} parent=5 // pred_region
        %s145 = ssub.s32 %s12, 1
        %p146 = scmp.lt.s32.totalorder %s17, 1
        %s147 = scalar_select %p146, %s17, 1
        %s148 = smul.addr %s147, 37
        %s149 = smul.addr %s148, 4
        %s150 = scalar_lea.vmem %s0, %s149
        %p151 = pneg %p38
        %p152 = pneg %p35
        %p153 = pneg %p59
        %p154 = pneg %p56
        %p155 = pneg %p80
        %p156 = pneg %p77
        %p157 = pneg %p106
        %p158 = pneg %p103
        %s159 = sand.u32 %s93, 1
        %s160 = scalar_lea.sflag [#allocation3], %s159
        %s161 = sand.u32 %s93, 1
        %s162 = smul.addr %s161, 136
        %s163 = scalar_lea.vmem [#allocation2], %s162
        %p164 = scmp.lt.s32.totalorder %s17, 1
        %s165 = scalar_select %p164, %s17, 1
        %s166 = smul.addr %s165, 37
        %s167 = smul.addr %s166, 4
        %s168 = scalar_lea.vmem %s0, %s167
        %v170 = vld [vmem:[%s168] sm:$0xf]
        %v171 = vld [vmem:[%s168 + $0x4] sm:$0xf]
        %v172 = vld [vmem:[%s168 + $0x8] sm:$0xf]
        %v173 = vld [vmem:[%s168 + $0xc] sm:$0xf]
        %v174 = vld [vmem:[%s168 + $0x10] sm:$0xf]
        %v175 = vld [vmem:[%s168 + $0x14] sm:$0xf]
        %v176 = vld [vmem:[%s168 + $0x18] sm:$0xf]
        %v177 = vld [vmem:[%s168 + $0x1c] sm:$0xf]
        %v178 = vld [vmem:[%s168 + $0x20] sm:$0xf]
        %v179 = vld [vmem:[%s168 + $0x24] sm:$0xf]
        %v180 = vld [vmem:[%s168 + $0x28] sm:$0xf]
        %v181 = vld [vmem:[%s168 + $0x2c] sm:$0xf]
        %v182 = vld [vmem:[%s168 + $0x30] sm:$0xf]
        %v183 = vld [vmem:[%s168 + $0x34] sm:$0xf]
        %v184 = vld [vmem:[%s168 + $0x38] sm:$0xf]
        %v185 = vld [vmem:[%s168 + $0x3c] sm:$0xf]
        %v186 = vld [vmem:[%s168 + $0x40] sm:$0xf]
        %v187 = vld [vmem:[%s168 + $0x44] sm:$0xf]
        %v188 = vld [vmem:[%s168 + $0x48] sm:$0xf]
        %v189 = vld [vmem:[%s168 + $0x4c] sm:$0xf]
        %v190 = vld [vmem:[%s168 + $0x50] sm:$0xf]
        %v191 = vld [vmem:[%s168 + $0x54] sm:$0xf]
        %v192 = vld [vmem:[%s168 + $0x58] sm:$0xf]
        %v193 = vld [vmem:[%s168 + $0x5c] sm:$0xf]
        %v194 = vld [vmem:[%s168 + $0x60] sm:$0xf]
        %v195 = vld [vmem:[%s168 + $0x64] sm:$0xf]
        %v196 = vld [vmem:[%s168 + $0x68] sm:$0xf]
        %v197 = vld [vmem:[%s168 + $0x6c] sm:$0xf]
        %v198 = vld [vmem:[%s168 + $0x70] sm:$0xf]
        %v199 = vld [vmem:[%s168 + $0x74] sm:$0xf]
        %v200 = vld [vmem:[%s168 + $0x78] sm:$0xf]
        %v201 = vld [vmem:[%s168 + $0x7c] sm:$0xf]
        %v202 = vld [vmem:[%s168 + $0x80] sm:$0xf]
        %v203 = vld [vmem:[%s168 + $0x84] sm:$0xf]
        %v204 = vld [vmem:[%s1] sm:$0xf]
        %v205 = vld [vmem:[%s1 + $0x4] sm:$0xf]
        %v206 = vld [vmem:[%s168 + $0x88] sm:$0x1]
        %s207 = scalar_lea.vmem %s1, 8
        %v208 = vld [vmem:[%s207] sm:$0xf]
        %v209 = vld [vmem:[%s207 + $0x4] sm:$0xf]
        %v245 = vunpack.c.l.b16 %v170
        %v246 = vunpack.c.l.b16 %v171
        %v247 = vunpack.c.l.b16 %v172
        %v248 = vunpack.c.l.b16 %v173
        %v249 = vunpack.c.l.b16 %v174
        %v250 = vunpack.c.l.b16 %v175
        %v251 = vunpack.c.l.b16 %v176
        %v252 = vunpack.c.l.b16 %v177
        %v253 = vunpack.c.l.b16 %v178
        %v254 = vunpack.c.l.b16 %v179
        %v255 = vunpack.c.l.b16 %v180
        %v256 = vunpack.c.l.b16 %v181
        %v257 = vunpack.c.l.b16 %v182
        %v258 = vunpack.c.l.b16 %v183
        %v259 = vunpack.c.l.b16 %v184
        %v260 = vunpack.c.l.b16 %v185
        %v261 = vunpack.c.l.b16 %v186
        %v262 = vunpack.c.l.b16 %v187
        %v263 = vunpack.c.l.b16 %v188
        %v264 = vunpack.c.l.b16 %v189
        %v265 = vunpack.c.l.b16 %v190
        %v266 = vunpack.c.l.b16 %v191
        %v267 = vunpack.c.l.b16 %v192
        %v268 = vunpack.c.l.b16 %v193
        %v269 = vunpack.c.l.b16 %v194
        %v270 = vunpack.c.l.b16 %v195
        %v271 = vunpack.c.l.b16 %v196
        %v272 = vunpack.c.l.b16 %v197
        %v273 = vunpack.c.l.b16 %v198
        %v274 = vunpack.c.l.b16 %v199
        %v275 = vunpack.c.l.b16 %v200
        %v276 = vunpack.c.l.b16 %v201
        %v277 = vunpack.c.l.b16 %v202
        %v278 = vunpack.c.l.b16 %v203
        %v279 = vunpack.c.l.b16 %v206
        %v280 = vpack.c.b16 %v246, %v245
        %v281 = vpack.c.b16 %v248, %v247
        %v282 = vpack.c.b16 %v250, %v249
        %v283 = vpack.c.b16 %v252, %v251
        %v284 = vpack.c.b16 %v254, %v253
        %v285 = vpack.c.b16 %v256, %v255
        %v286 = vpack.c.b16 %v258, %v257
        %v287 = vpack.c.b16 %v260, %v259
        %v288 = vpack.c.b16 %v262, %v261
        %v289 = vpack.c.b16 %v264, %v263
        %v290 = vpack.c.b16 %v266, %v265
        %v291 = vpack.c.b16 %v268, %v267
        %v292 = vpack.c.b16 %v270, %v269
        %v293 = vpack.c.b16 %v272, %v271
        %v294 = vpack.c.b16 %v274, %v273
        %v295 = vpack.c.b16 %v276, %v275
        %v296 = vpack.c.b16 %v278, %v277
        %v297 = vpack.c.b16 %v279, %v279
        %vm298 = vsmask.f32 7424
        %v300 = vshrl.u32 %v280, 16
        %v302 = vshll.u32 %v280, 16
        %v304 = vrot.slane %v302, 1
        %v305 = vor.u32 %v300, %v304
        %v307 = vshll.u32 %v281, 16
        %v309 = vrot.slane %v307, 1
        %v310 = vsel %vm298, %v305, %v309
        %v311 = vshrl.u32 %v281, 16
        %v313 = vor.u32 %v311, %v309
        %v315 = vshll.u32 %v282, 16
        %v317 = vrot.slane %v315, 1
        %v318 = vsel %vm298, %v313, %v317
        %v319 = vshrl.u32 %v282, 16
        %v321 = vor.u32 %v319, %v317
        %v323 = vshll.u32 %v283, 16
        %v325 = vrot.slane %v323, 1
        %v326 = vsel %vm298, %v321, %v325
        %v327 = vshrl.u32 %v283, 16
        %v329 = vor.u32 %v327, %v325
        %v331 = vshll.u32 %v284, 16
        %v333 = vrot.slane %v331, 1
        %v334 = vsel %vm298, %v329, %v333
        %v335 = vshrl.u32 %v284, 16
        %v337 = vor.u32 %v335, %v333
        %v339 = vshll.u32 %v285, 16
        %v341 = vrot.slane %v339, 1
        %v342 = vsel %vm298, %v337, %v341
        %v343 = vshrl.u32 %v285, 16
        %v345 = vor.u32 %v343, %v341
        %v347 = vshll.u32 %v286, 16
        %v349 = vrot.slane %v347, 1
        %v350 = vsel %vm298, %v345, %v349
        %v351 = vshrl.u32 %v286, 16
        %v353 = vor.u32 %v351, %v349
        %v355 = vshll.u32 %v287, 16
        %v357 = vrot.slane %v355, 1
        %v358 = vsel %vm298, %v353, %v357
        %v359 = vshrl.u32 %v287, 16
        %v361 = vor.u32 %v359, %v357
        %v363 = vshll.u32 %v288, 16
        %v365 = vrot.slane %v363, 1
        %v366 = vsel %vm298, %v361, %v365
        %v367 = vshrl.u32 %v288, 16
        %v369 = vor.u32 %v367, %v365
        %v371 = vshll.u32 %v289, 16
        %v373 = vrot.slane %v371, 1
        %v374 = vsel %vm298, %v369, %v373
        %v375 = vshrl.u32 %v289, 16
        %v377 = vor.u32 %v375, %v373
        %v379 = vshll.u32 %v290, 16
        %v381 = vrot.slane %v379, 1
        %v382 = vsel %vm298, %v377, %v381
        %v383 = vshrl.u32 %v290, 16
        %v385 = vor.u32 %v383, %v381
        %v387 = vshll.u32 %v291, 16
        %v389 = vrot.slane %v387, 1
        %v390 = vsel %vm298, %v385, %v389
        %v391 = vshrl.u32 %v291, 16
        %v393 = vor.u32 %v391, %v389
        %v395 = vshll.u32 %v292, 16
        %v397 = vrot.slane %v395, 1
        %v398 = vsel %vm298, %v393, %v397
        %v399 = vshrl.u32 %v292, 16
        %v401 = vor.u32 %v399, %v397
        %v403 = vshll.u32 %v293, 16
        %v405 = vrot.slane %v403, 1
        %v406 = vsel %vm298, %v401, %v405
        %v407 = vshrl.u32 %v293, 16
        %v409 = vor.u32 %v407, %v405
        %v411 = vshll.u32 %v294, 16
        %v413 = vrot.slane %v411, 1
        %v414 = vsel %vm298, %v409, %v413
        %v415 = vshrl.u32 %v294, 16
        %v417 = vor.u32 %v415, %v413
        %v419 = vshll.u32 %v295, 16
        %v421 = vrot.slane %v419, 1
        %v422 = vsel %vm298, %v417, %v421
        %v423 = vshrl.u32 %v295, 16
        %v425 = vor.u32 %v423, %v421
        %v427 = vshll.u32 %v296, 16
        %v429 = vrot.slane %v427, 1
        %v430 = vsel %vm298, %v425, %v429
        %v431 = vshrl.u32 %v296, 16
        %v433 = vor.u32 %v431, %v429
        %v435 = vshll.u32 %v297, 16
        %v437 = vrot.slane %v435, 1
        %v438 = vsel %vm298, %v433, %v437
        %v441 = vunpack.c.l.b16 %v208
        %v442 = vunpack.c.l.b16 %v209
        %v443 = vpack.c.b16 %v442, %v441
        %vm445 = vcmask 130048
        %v447 = vsel %vm445, %v310, 0
        %v450 = vsel %vm445, %v318, 0
        %v453 = vsel %vm445, %v326, 0
        %v456 = vsel %vm445, %v334, 0
        %v459 = vsel %vm445, %v342, 0
        %v462 = vsel %vm445, %v350, 0
        %v465 = vsel %vm445, %v358, 0
        %v468 = vsel %vm445, %v366, 0
        %v471 = vsel %vm445, %v374, 0
        %v474 = vsel %vm445, %v382, 0
        %v477 = vsel %vm445, %v390, 0
        %v480 = vsel %vm445, %v398, 0
        %v483 = vsel %vm445, %v406, 0
        %v486 = vsel %vm445, %v414, 0
        %v489 = vsel %vm445, %v422, 0
        %v492 = vsel %vm445, %v430, 0
        %v495 = vsel %vm445, %v438, 0
        %497 = vmatprep.subr.bf16.mxu0 0
        %498 = vmatpush1.bf16.msra.mxu0 0
        %499 = vmatprep.subr.bf16.mxu0 0
        %500 = vmatpush1.bf16.msra.mxu0 0
        %501 = vmatprep.subr.bf16.mxu0 0
        %502 = vmatpush1.bf16.msra.mxu0 0
        %503 = vmatprep.subr.bf16.mxu0 0
        %504 = vmatpush1.bf16.msra.mxu0 0
        %505 = vmatprep.subr.bf16.mxu0 0
        %506 = vmatpush1.bf16.msra.mxu0 0
        %507 = vmatprep.subr.bf16.mxu0 0
        %508 = vmatpush1.bf16.msra.mxu0 0
        %509 = vmatprep.subr.bf16.mxu0 0
        %510 = vmatpush1.bf16.msra.mxu0 0
        %511 = vmatprep.subr.bf16.mxu0 0
        %512 = vmatpush1.bf16.msra.mxu0 %v443
        %513 = vmatprep.subr.bf16.mxu0 0
        %514 = vmatpush2.bf16.msra.mxu0 0
        %515 = vmatprep.subr.bf16.mxu0 0
        %516 = vmatpush2.bf16.msra.mxu0 0
        %517 = vmatprep.subr.bf16.mxu0 0
        %518 = vmatpush2.bf16.msra.mxu0 0
        %519 = vmatprep.subr.bf16.mxu0 0
        %520 = vmatpush2.bf16.msra.mxu0 0
        %521 = vmatprep.subr.bf16.mxu0 0
        %522 = vmatpush2.bf16.msra.mxu0 0
        %523 = vmatprep.subr.bf16.mxu0 0
        %524 = vmatpush2.bf16.msra.mxu0 0
        %525 = vmatprep.subr.bf16.mxu0 0
        %526 = vmatpush2.bf16.msra.mxu0 0
        %527 = vmatprep.subr.bf16.mxu0 0
        %528 = vmatpush2.bf16.msra.mxu0 0
        %529 = vmatprep.mubr.bf16.mxu0 0
        %530 = vmatmul.mubr.bf16.gmra.mxu0 %v447
        %v531 = vpop.f32.mrf.mxu0
        %v532 = vadd.f32 0.0, %v531
        %v533 = vpop.f32.mrf.mxu0
        %v534 = vpop.f32.mrf.mxu0
        %v535 = vadd.f32 0.0, %v534
        %v536 = vpop.f32.mrf.mxu0
        %537 = vmatprep.mubr.bf16.mxu0 0
        %538 = vmatmul.mubr.bf16.gmra.mxu0 %v450
        %v539 = vpop.f32.mrf.mxu0
        %v540 = vadd.f32 0.0, %v539
        %v541 = vpop.f32.mrf.mxu0
        %v542 = vpop.f32.mrf.mxu0
        %v543 = vadd.f32 0.0, %v542
        %v544 = vpop.f32.mrf.mxu0
        %545 = vmatprep.mubr.bf16.mxu0 0
        %546 = vmatmul.mubr.bf16.gmra.mxu0 %v453
        %v547 = vpop.f32.mrf.mxu0
        %v548 = vadd.f32 0.0, %v547
        %v549 = vpop.f32.mrf.mxu0
        %v550 = vpop.f32.mrf.mxu0
        %v551 = vadd.f32 0.0, %v550
        %v552 = vpop.f32.mrf.mxu0
        %553 = vmatprep.mubr.bf16.mxu0 0
        %554 = vmatmul.mubr.bf16.gmra.mxu0 %v456
        %v555 = vpop.f32.mrf.mxu0
        %v556 = vadd.f32 0.0, %v555
        %v557 = vpop.f32.mrf.mxu0
        %v558 = vpop.f32.mrf.mxu0
        %v559 = vadd.f32 0.0, %v558
        %v560 = vpop.f32.mrf.mxu0
        %561 = vmatprep.mubr.bf16.mxu0 0
        %562 = vmatmul.mubr.bf16.gmra.mxu0 %v459
        %v563 = vpop.f32.mrf.mxu0
        %v564 = vadd.f32 0.0, %v563
        %v565 = vpop.f32.mrf.mxu0
        %v566 = vpop.f32.mrf.mxu0
        %v567 = vadd.f32 0.0, %v566
        %v568 = vpop.f32.mrf.mxu0
        %569 = vmatprep.mubr.bf16.mxu0 0
        %570 = vmatmul.mubr.bf16.gmra.mxu0 %v462
        %v571 = vpop.f32.mrf.mxu0
        %v572 = vadd.f32 0.0, %v571
        %v573 = vpop.f32.mrf.mxu0
        %v574 = vpop.f32.mrf.mxu0
        %v575 = vadd.f32 0.0, %v574
        %v576 = vpop.f32.mrf.mxu0
        %577 = vmatprep.mubr.bf16.mxu0 0
        %578 = vmatmul.mubr.bf16.gmra.mxu0 %v465
        %v579 = vpop.f32.mrf.mxu0
        %v580 = vadd.f32 0.0, %v579
        %v581 = vpop.f32.mrf.mxu0
        %v582 = vpop.f32.mrf.mxu0
        %v583 = vadd.f32 0.0, %v582
        %v584 = vpop.f32.mrf.mxu0
        %585 = vmatprep.mubr.bf16.mxu0 0
        %586 = vmatmul.mubr.bf16.gmra.mxu0 %v468
        %v587 = vpop.f32.mrf.mxu0
        %v588 = vadd.f32 0.0, %v587
        %v589 = vpop.f32.mrf.mxu0
        %v590 = vpop.f32.mrf.mxu0
        %v591 = vadd.f32 0.0, %v590
        %v592 = vpop.f32.mrf.mxu0
        %593 = vmatprep.mubr.bf16.mxu0 0
        %594 = vmatmul.mubr.bf16.gmra.mxu0 %v471
        %v595 = vpop.f32.mrf.mxu0
        %v596 = vadd.f32 0.0, %v595
        %v597 = vpop.f32.mrf.mxu0
        %v598 = vpop.f32.mrf.mxu0
        %v599 = vadd.f32 0.0, %v598
        %v600 = vpop.f32.mrf.mxu0
        %601 = vmatprep.mubr.bf16.mxu0 0
        %602 = vmatmul.mubr.bf16.gmra.mxu0 %v474
        %v603 = vpop.f32.mrf.mxu0
        %v604 = vadd.f32 0.0, %v603
        %v605 = vpop.f32.mrf.mxu0
        %v606 = vpop.f32.mrf.mxu0
        %v607 = vadd.f32 0.0, %v606
        %v608 = vpop.f32.mrf.mxu0
        %609 = vmatprep.mubr.bf16.mxu0 0
        %610 = vmatmul.mubr.bf16.gmra.mxu0 %v477
        %v611 = vpop.f32.mrf.mxu0
        %v612 = vadd.f32 0.0, %v611
        %v613 = vpop.f32.mrf.mxu0
        %v614 = vpop.f32.mrf.mxu0
        %v615 = vadd.f32 0.0, %v614
        %v616 = vpop.f32.mrf.mxu0
        %617 = vmatprep.mubr.bf16.mxu0 0
        %618 = vmatmul.mubr.bf16.gmra.mxu0 %v480
        %v619 = vpop.f32.mrf.mxu0
        %v620 = vadd.f32 0.0, %v619
        %v621 = vpop.f32.mrf.mxu0
        %v622 = vpop.f32.mrf.mxu0
        %v623 = vadd.f32 0.0, %v622
        %v624 = vpop.f32.mrf.mxu0
        %625 = vmatprep.mubr.bf16.mxu0 0
        %626 = vmatmul.mubr.bf16.gmra.mxu0 %v483
        %v627 = vpop.f32.mrf.mxu0
        %v628 = vadd.f32 0.0, %v627
        %v629 = vpop.f32.mrf.mxu0
        %v630 = vpop.f32.mrf.mxu0
        %v631 = vadd.f32 0.0, %v630
        %v632 = vpop.f32.mrf.mxu0
        %633 = vmatprep.mubr.bf16.mxu0 0
        %634 = vmatmul.mubr.bf16.gmra.mxu0 %v486
        %v635 = vpop.f32.mrf.mxu0
        %v636 = vadd.f32 0.0, %v635
        %v637 = vpop.f32.mrf.mxu0
        %v638 = vpop.f32.mrf.mxu0
        %v639 = vadd.f32 0.0, %v638
        %v640 = vpop.f32.mrf.mxu0
        %641 = vmatprep.mubr.bf16.mxu0 0
        %642 = vmatmul.mubr.bf16.gmra.mxu0 %v489
        %v643 = vpop.f32.mrf.mxu0
        %v644 = vadd.f32 0.0, %v643
        %v645 = vpop.f32.mrf.mxu0
        %v646 = vpop.f32.mrf.mxu0
        %v647 = vadd.f32 0.0, %v646
        %v648 = vpop.f32.mrf.mxu0
        %649 = vmatprep.mubr.bf16.mxu0 0
        %650 = vmatmul.mubr.bf16.gmra.mxu0 %v492
        %v651 = vpop.f32.mrf.mxu0
        %v652 = vadd.f32 0.0, %v651
        %v653 = vpop.f32.mrf.mxu0
        %v654 = vpop.f32.mrf.mxu0
        %v655 = vadd.f32 0.0, %v654
        %v656 = vpop.f32.mrf.mxu0
        %657 = vmatprep.mubr.bf16.mxu0 0
        %658 = vmatmul.mubr.bf16.gmra.mxu0 %v495
        %v659 = vpop.f32.mrf.mxu0
        %v660 = vadd.f32 0.0, %v659
        %v661 = vpop.f32.mrf.mxu0
        %v662 = vpop.f32.mrf.mxu0
        %v663 = vadd.f32 0.0, %v662
        %v664 = vpop.f32.mrf.mxu0
        %665 = vdwg.mxu0
        %v668 = vunpack.c.l.b16 %v204
        %v669 = vunpack.c.l.b16 %v205
        %v670 = vpack.c.b16 %v669, %v668
        %v672 = vsel %vm445, %v280, 0
        %v674 = vsel %vm445, %v281, 0
        %v676 = vsel %vm445, %v282, 0
        %v678 = vsel %vm445, %v283, 0
        %v680 = vsel %vm445, %v284, 0
        %v682 = vsel %vm445, %v285, 0
        %v684 = vsel %vm445, %v286, 0
        %v686 = vsel %vm445, %v287, 0
        %v688 = vsel %vm445, %v288, 0
        %v690 = vsel %vm445, %v289, 0
        %v692 = vsel %vm445, %v290, 0
        %v694 = vsel %vm445, %v291, 0
        %v696 = vsel %vm445, %v292, 0
        %v698 = vsel %vm445, %v293, 0
        %v700 = vsel %vm445, %v294, 0
        %v702 = vsel %vm445, %v295, 0
        %v704 = vsel %vm445, %v296, 0
        %706 = vmatprep.subr.bf16.mxu0 0
        %707 = vmatpush1.bf16.msra.mxu0 0
        %708 = vmatprep.subr.bf16.mxu0 0
        %709 = vmatpush1.bf16.msra.mxu0 0
        %710 = vmatprep.subr.bf16.mxu0 0
        %711 = vmatpush1.bf16.msra.mxu0 0
        %712 = vmatprep.subr.bf16.mxu0 0
        %713 = vmatpush1.bf16.msra.mxu0 0
        %714 = vmatprep.subr.bf16.mxu0 0
        %715 = vmatpush1.bf16.msra.mxu0 0
        %716 = vmatprep.subr.bf16.mxu0 0
        %717 = vmatpush1.bf16.msra.mxu0 0
        %718 = vmatprep.subr.bf16.mxu0 0
        %719 = vmatpush1.bf16.msra.mxu0 0
        %720 = vmatprep.subr.bf16.mxu0 0
        %721 = vmatpush1.bf16.msra.mxu0 %v670
        %722 = vmatprep.subr.bf16.mxu0 0
        %723 = vmatpush2.bf16.msra.mxu0 0
        %724 = vmatprep.subr.bf16.mxu0 0
        %725 = vmatpush2.bf16.msra.mxu0 0
        %726 = vmatprep.subr.bf16.mxu0 0
        %727 = vmatpush2.bf16.msra.mxu0 0
        %728 = vmatprep.subr.bf16.mxu0 0
        %729 = vmatpush2.bf16.msra.mxu0 0
        %730 = vmatprep.subr.bf16.mxu0 0
        %731 = vmatpush2.bf16.msra.mxu0 0
        %732 = vmatprep.subr.bf16.mxu0 0
        %733 = vmatpush2.bf16.msra.mxu0 0
        %734 = vmatprep.subr.bf16.mxu0 0
        %735 = vmatpush2.bf16.msra.mxu0 0
        %736 = vmatprep.subr.bf16.mxu0 0
        %737 = vmatpush2.bf16.msra.mxu0 0
        %738 = vmatprep.mubr.bf16.mxu0 0
        %739 = vmatmul.mubr.bf16.gmra.mxu0 %v672
        %v740 = vpop.f32.mrf.mxu0
        %v741 = vadd.f32 %v532, %v740
        %v742 = vpop.f32.mrf.mxu0
        %v743 = vpop.f32.mrf.mxu0
        %v744 = vadd.f32 %v535, %v743
        %v745 = vpop.f32.mrf.mxu0
        %746 = vmatprep.mubr.bf16.mxu0 0
        %747 = vmatmul.mubr.bf16.gmra.mxu0 %v674
        %v748 = vpop.f32.mrf.mxu0
        %v749 = vadd.f32 %v540, %v748
        %v750 = vpop.f32.mrf.mxu0
        %v751 = vpop.f32.mrf.mxu0
        %v752 = vadd.f32 %v543, %v751
        %v753 = vpop.f32.mrf.mxu0
        %754 = vmatprep.mubr.bf16.mxu0 0
        %755 = vmatmul.mubr.bf16.gmra.mxu0 %v676
        %v756 = vpop.f32.mrf.mxu0
        %v757 = vadd.f32 %v548, %v756
        %v758 = vpop.f32.mrf.mxu0
        %v759 = vpop.f32.mrf.mxu0
        %v760 = vadd.f32 %v551, %v759
        %v761 = vpop.f32.mrf.mxu0
        %762 = vmatprep.mubr.bf16.mxu0 0
        %763 = vmatmul.mubr.bf16.gmra.mxu0 %v678
        %v764 = vpop.f32.mrf.mxu0
        %v765 = vadd.f32 %v556, %v764
        %v766 = vpop.f32.mrf.mxu0
        %v767 = vpop.f32.mrf.mxu0
        %v768 = vadd.f32 %v559, %v767
        %v769 = vpop.f32.mrf.mxu0
        %770 = vmatprep.mubr.bf16.mxu0 0
        %771 = vmatmul.mubr.bf16.gmra.mxu0 %v680
        %v772 = vpop.f32.mrf.mxu0
        %v773 = vadd.f32 %v564, %v772
        %v774 = vpop.f32.mrf.mxu0
        %v775 = vpop.f32.mrf.mxu0
        %v776 = vadd.f32 %v567, %v775
        %v777 = vpop.f32.mrf.mxu0
        %778 = vmatprep.mubr.bf16.mxu0 0
        %779 = vmatmul.mubr.bf16.gmra.mxu0 %v682
        %v780 = vpop.f32.mrf.mxu0
        %v781 = vadd.f32 %v572, %v780
        %v782 = vpop.f32.mrf.mxu0
        %v783 = vpop.f32.mrf.mxu0
        %v784 = vadd.f32 %v575, %v783
        %v785 = vpop.f32.mrf.mxu0
        %786 = vmatprep.mubr.bf16.mxu0 0
        %787 = vmatmul.mubr.bf16.gmra.mxu0 %v684
        %v788 = vpop.f32.mrf.mxu0
        %v789 = vadd.f32 %v580, %v788
        %v790 = vpop.f32.mrf.mxu0
        %v791 = vpop.f32.mrf.mxu0
        %v792 = vadd.f32 %v583, %v791
        %v793 = vpop.f32.mrf.mxu0
        %794 = vmatprep.mubr.bf16.mxu0 0
        %795 = vmatmul.mubr.bf16.gmra.mxu0 %v686
        %v796 = vpop.f32.mrf.mxu0
        %v797 = vadd.f32 %v588, %v796
        %v798 = vpop.f32.mrf.mxu0
        %v799 = vpop.f32.mrf.mxu0
        %v800 = vadd.f32 %v591, %v799
        %v801 = vpop.f32.mrf.mxu0
        %802 = vmatprep.mubr.bf16.mxu0 0
        %803 = vmatmul.mubr.bf16.gmra.mxu0 %v688
        %v804 = vpop.f32.mrf.mxu0
        %v805 = vadd.f32 %v596, %v804
        %v806 = vpop.f32.mrf.mxu0
        %v807 = vpop.f32.mrf.mxu0
        %v808 = vadd.f32 %v599, %v807
        %v809 = vpop.f32.mrf.mxu0
        %810 = vmatprep.mubr.bf16.mxu0 0
        %811 = vmatmul.mubr.bf16.gmra.mxu0 %v690
        %v812 = vpop.f32.mrf.mxu0
        %v813 = vadd.f32 %v604, %v812
        %v814 = vpop.f32.mrf.mxu0
        %v815 = vpop.f32.mrf.mxu0
        %v816 = vadd.f32 %v607, %v815
        %v817 = vpop.f32.mrf.mxu0
        %818 = vmatprep.mubr.bf16.mxu0 0
        %819 = vmatmul.mubr.bf16.gmra.mxu0 %v692
        %v820 = vpop.f32.mrf.mxu0
        %v821 = vadd.f32 %v612, %v820
        %v822 = vpop.f32.mrf.mxu0
        %v823 = vpop.f32.mrf.mxu0
        %v824 = vadd.f32 %v615, %v823
        %v825 = vpop.f32.mrf.mxu0
        %826 = vmatprep.mubr.bf16.mxu0 0
        %827 = vmatmul.mubr.bf16.gmra.mxu0 %v694
        %v828 = vpop.f32.mrf.mxu0
        %v829 = vadd.f32 %v620, %v828
        %v830 = vpop.f32.mrf.mxu0
        %v831 = vpop.f32.mrf.mxu0
        %v832 = vadd.f32 %v623, %v831
        %v833 = vpop.f32.mrf.mxu0
        %834 = vmatprep.mubr.bf16.mxu0 0
        %835 = vmatmul.mubr.bf16.gmra.mxu0 %v696
        %v836 = vpop.f32.mrf.mxu0
        %v837 = vadd.f32 %v628, %v836
        %v838 = vpop.f32.mrf.mxu0
        %v839 = vpop.f32.mrf.mxu0
        %v840 = vadd.f32 %v631, %v839
        %v841 = vpop.f32.mrf.mxu0
        %842 = vmatprep.mubr.bf16.mxu0 0
        %843 = vmatmul.mubr.bf16.gmra.mxu0 %v698
        %v844 = vpop.f32.mrf.mxu0
        %v845 = vadd.f32 %v636, %v844
        %v846 = vpop.f32.mrf.mxu0
        %v847 = vpop.f32.mrf.mxu0
        %v848 = vadd.f32 %v639, %v847
        %v849 = vpop.f32.mrf.mxu0
        %850 = vmatprep.mubr.bf16.mxu0 0
        %851 = vmatmul.mubr.bf16.gmra.mxu0 %v700
        %v852 = vpop.f32.mrf.mxu0
        %v853 = vadd.f32 %v644, %v852
        %v854 = vpop.f32.mrf.mxu0
        %v855 = vpop.f32.mrf.mxu0
        %v856 = vadd.f32 %v647, %v855
        %v857 = vpop.f32.mrf.mxu0
        %858 = vmatprep.mubr.bf16.mxu0 0
        %859 = vmatmul.mubr.bf16.gmra.mxu0 %v702
        %v860 = vpop.f32.mrf.mxu0
        %v861 = vadd.f32 %v652, %v860
        %v862 = vpop.f32.mrf.mxu0
        %v863 = vpop.f32.mrf.mxu0
        %v864 = vadd.f32 %v655, %v863
        %v865 = vpop.f32.mrf.mxu0
        %866 = vmatprep.mubr.bf16.mxu0 0
        %867 = vmatmul.mubr.bf16.gmra.mxu0 %v704
        %v868 = vpop.f32.mrf.mxu0
        %v869 = vadd.f32 %v660, %v868
        %v870 = vpop.f32.mrf.mxu0
        %v871 = vpop.f32.mrf.mxu0
        %v872 = vadd.f32 %v663, %v871
        %v873 = vpop.f32.mrf.mxu0
        %874 = vdwg.mxu0
        %v875 = vld [vmem:[%s168 + $0x8] sm:$0xf]
        %v876 = vld [vmem:[%s168 + $0xc] sm:$0xf]
        %v877 = vld [vmem:[%s168 + $0x10] sm:$0xf]
        %v878 = vld [vmem:[%s168 + $0x14] sm:$0xf]
        %v879 = vld [vmem:[%s168 + $0x18] sm:$0xf]
        %v880 = vld [vmem:[%s168 + $0x1c] sm:$0xf]
        %v881 = vld [vmem:[%s168 + $0x20] sm:$0xf]
        %v882 = vld [vmem:[%s168 + $0x24] sm:$0xf]
        %v883 = vld [vmem:[%s168 + $0x28] sm:$0xf]
        %v884 = vld [vmem:[%s168 + $0x2c] sm:$0xf]
        %v885 = vld [vmem:[%s168 + $0x30] sm:$0xf]
        %v886 = vld [vmem:[%s168 + $0x34] sm:$0xf]
        %v887 = vld [vmem:[%s168 + $0x38] sm:$0xf]
        %v888 = vld [vmem:[%s168 + $0x3c] sm:$0xf]
        %v889 = vld [vmem:[%s168 + $0x40] sm:$0xf]
        %v890 = vld [vmem:[%s168 + $0x44] sm:$0xf]
        %v891 = vld [vmem:[%s168 + $0x48] sm:$0xf]
        %v892 = vld [vmem:[%s168 + $0x4c] sm:$0xf]
        %v893 = vld [vmem:[%s168 + $0x50] sm:$0xf]
        %v894 = vld [vmem:[%s168 + $0x54] sm:$0xf]
        %v895 = vld [vmem:[%s168 + $0x58] sm:$0xf]
        %v896 = vld [vmem:[%s168 + $0x5c] sm:$0xf]
        %v897 = vld [vmem:[%s168 + $0x60] sm:$0xf]
        %v898 = vld [vmem:[%s168 + $0x64] sm:$0xf]
        %v899 = vld [vmem:[%s168 + $0x68] sm:$0xf]
        %v900 = vld [vmem:[%s168 + $0x6c] sm:$0xf]
        %v901 = vld [vmem:[%s168 + $0x70] sm:$0xf]
        %v902 = vld [vmem:[%s168 + $0x74] sm:$0xf]
        %v903 = vld [vmem:[%s168 + $0x78] sm:$0xf]
        %v904 = vld [vmem:[%s168 + $0x7c] sm:$0xf]
        %v905 = vld [vmem:[%s168 + $0x80] sm:$0xf]
        %v906 = vld [vmem:[%s168 + $0x84] sm:$0xf]
        %v907 = vld [vmem:[%s168 + $0x88] sm:$0xf]
        %v908 = vld [vmem:[%s168 + $0x8c] sm:$0xf]
        %v909 = vld [vmem:[%s168 + $0x90] sm:$0x1]
        %s910 = scalar_lea.vmem %s1, 16
        %v911 = vld [vmem:[%s910] sm:$0xf]
        %v912 = vld [vmem:[%s910 + $0x4] sm:$0xf]
        %v948 = vunpack.c.l.b16 %v875
        %v949 = vunpack.c.l.b16 %v876
        %v950 = vunpack.c.l.b16 %v877
        %v951 = vunpack.c.l.b16 %v878
        %v952 = vunpack.c.l.b16 %v879
        %v953 = vunpack.c.l.b16 %v880
        %v954 = vunpack.c.l.b16 %v881
        %v955 = vunpack.c.l.b16 %v882
        %v956 = vunpack.c.l.b16 %v883
        %v957 = vunpack.c.l.b16 %v884
        %v958 = vunpack.c.l.b16 %v885
        %v959 = vunpack.c.l.b16 %v886
        %v960 = vunpack.c.l.b16 %v887
        %v961 = vunpack.c.l.b16 %v888
        %v962 = vunpack.c.l.b16 %v889
        %v963 = vunpack.c.l.b16 %v890
        %v964 = vunpack.c.l.b16 %v891
        %v965 = vunpack.c.l.b16 %v892
        %v966 = vunpack.c.l.b16 %v893
        %v967 = vunpack.c.l.b16 %v894
        %v968 = vunpack.c.l.b16 %v895
        %v969 = vunpack.c.l.b16 %v896
        %v970 = vunpack.c.l.b16 %v897
        %v971 = vunpack.c.l.b16 %v898
        %v972 = vunpack.c.l.b16 %v899
        %v973 = vunpack.c.l.b16 %v900
        %v974 = vunpack.c.l.b16 %v901
        %v975 = vunpack.c.l.b16 %v902
        %v976 = vunpack.c.l.b16 %v903
        %v977 = vunpack.c.l.b16 %v904
        %v978 = vunpack.c.l.b16 %v905
        %v979 = vunpack.c.l.b16 %v906
        %v980 = vunpack.c.l.b16 %v907
        %v981 = vunpack.c.l.b16 %v908
        %v982 = vunpack.c.l.b16 %v909
        %v983 = vpack.c.b16 %v949, %v948
        %v984 = vpack.c.b16 %v951, %v950
        %v985 = vpack.c.b16 %v953, %v952
        %v986 = vpack.c.b16 %v955, %v954
        %v987 = vpack.c.b16 %v957, %v956
        %v988 = vpack.c.b16 %v959, %v958
        %v989 = vpack.c.b16 %v961, %v960
        %v990 = vpack.c.b16 %v963, %v962
        %v991 = vpack.c.b16 %v965, %v964
        %v992 = vpack.c.b16 %v967, %v966
        %v993 = vpack.c.b16 %v969, %v968
        %v994 = vpack.c.b16 %v971, %v970
        %v995 = vpack.c.b16 %v973, %v972
        %v996 = vpack.c.b16 %v975, %v974
        %v997 = vpack.c.b16 %v977, %v976
        %v998 = vpack.c.b16 %v979, %v978
        %v999 = vpack.c.b16 %v981, %v980
        %v1000 = vpack.c.b16 %v982, %v982
        %v1002 = vshrl.u32 %v983, 16
        %v1004 = vshll.u32 %v983, 16
        %v1006 = vrot.slane %v1004, 1
        %v1007 = vor.u32 %v1002, %v1006
        %v1009 = vshll.u32 %v984, 16
        %v1011 = vrot.slane %v1009, 1
        %v1012 = vsel %vm298, %v1007, %v1011
        %v1013 = vshrl.u32 %v984, 16
        %v1015 = vor.u32 %v1013, %v1011
        %v1017 = vshll.u32 %v985, 16
        %v1019 = vrot.slane %v1017, 1
        %v1020 = vsel %vm298, %v1015, %v1019
        %v1021 = vshrl.u32 %v985, 16
        %v1023 = vor.u32 %v1021, %v1019
        %v1025 = vshll.u32 %v986, 16
        %v1027 = vrot.slane %v1025, 1
        %v1028 = vsel %vm298, %v1023, %v1027
        %v1029 = vshrl.u32 %v986, 16
        %v1031 = vor.u32 %v1029, %v1027
        %v1033 = vshll.u32 %v987, 16
        %v1035 = vrot.slane %v1033, 1
        %v1036 = vsel %vm298, %v1031, %v1035
        %v1037 = vshrl.u32 %v987, 16
        %v1039 = vor.u32 %v1037, %v1035
        %v1041 = vshll.u32 %v988, 16
        %v1043 = vrot.slane %v1041, 1
        %v1044 = vsel %vm298, %v1039, %v1043
        %v1045 = vshrl.u32 %v988, 16
        %v1047 = vor.u32 %v1045, %v1043
        %v1049 = vshll.u32 %v989, 16
        %v1051 = vrot.slane %v1049, 1
        %v1052 = vsel %vm298, %v1047, %v1051
        %v1053 = vshrl.u32 %v989, 16
        %v1055 = vor.u32 %v1053, %v1051
        %v1057 = vshll.u32 %v990, 16
        %v1059 = vrot.slane %v1057, 1
        %v1060 = vsel %vm298, %v1055, %v1059
        %v1061 = vshrl.u32 %v990, 16
        %v1063 = vor.u32 %v1061, %v1059
        %v1065 = vshll.u32 %v991, 16
        %v1067 = vrot.slane %v1065, 1
        %v1068 = vsel %vm298, %v1063, %v1067
        %v1069 = vshrl.u32 %v991, 16
        %v1071 = vor.u32 %v1069, %v1067
        %v1073 = vshll.u32 %v992, 16
        %v1075 = vrot.slane %v1073, 1
        %v1076 = vsel %vm298, %v1071, %v1075
        %v1077 = vshrl.u32 %v992, 16
        %v1079 = vor.u32 %v1077, %v1075
        %v1081 = vshll.u32 %v993, 16
        %v1083 = vrot.slane %v1081, 1
        %v1084 = vsel %vm298, %v1079, %v1083
        %v1085 = vshrl.u32 %v993, 16
        %v1087 = vor.u32 %v1085, %v1083
        %v1089 = vshll.u32 %v994, 16
        %v1091 = vrot.slane %v1089, 1
        %v1092 = vsel %vm298, %v1087, %v1091
        %v1093 = vshrl.u32 %v994, 16
        %v1095 = vor.u32 %v1093, %v1091
        %v1097 = vshll.u32 %v995, 16
        %v1099 = vrot.slane %v1097, 1
        %v1100 = vsel %vm298, %v1095, %v1099
        %v1101 = vshrl.u32 %v995, 16
        %v1103 = vor.u32 %v1101, %v1099
        %v1105 = vshll.u32 %v996, 16
        %v1107 = vrot.slane %v1105, 1
        %v1108 = vsel %vm298, %v1103, %v1107
        %v1109 = vshrl.u32 %v996, 16
        %v1111 = vor.u32 %v1109, %v1107
        %v1113 = vshll.u32 %v997, 16
        %v1115 = vrot.slane %v1113, 1
        %v1116 = vsel %vm298, %v1111, %v1115
        %v1117 = vshrl.u32 %v997, 16
        %v1119 = vor.u32 %v1117, %v1115
        %v1121 = vshll.u32 %v998, 16
        %v1123 = vrot.slane %v1121, 1
        %v1124 = vsel %vm298, %v1119, %v1123
        %v1125 = vshrl.u32 %v998, 16
        %v1127 = vor.u32 %v1125, %v1123
        %v1129 = vshll.u32 %v999, 16
        %v1131 = vrot.slane %v1129, 1
        %v1132 = vsel %vm298, %v1127, %v1131
        %v1133 = vshrl.u32 %v999, 16
        %v1135 = vor.u32 %v1133, %v1131
        %v1137 = vshll.u32 %v1000, 16
        %v1139 = vrot.slane %v1137, 1
        %v1140 = vsel %vm298, %v1135, %v1139
        %v1143 = vunpack.c.l.b16 %v911
        %v1144 = vunpack.c.l.b16 %v912
        %v1145 = vpack.c.b16 %v1144, %v1143
        %v1148 = vsel %vm445, %v1012, 0
        %v1151 = vsel %vm445, %v1020, 0
        %v1154 = vsel %vm445, %v1028, 0
        %v1157 = vsel %vm445, %v1036, 0
        %v1160 = vsel %vm445, %v1044, 0
        %v1163 = vsel %vm445, %v1052, 0
        %v1166 = vsel %vm445, %v1060, 0
        %v1169 = vsel %vm445, %v1068, 0
        %v1172 = vsel %vm445, %v1076, 0
        %v1175 = vsel %vm445, %v1084, 0
        %v1178 = vsel %vm445, %v1092, 0
        %v1181 = vsel %vm445, %v1100, 0
        %v1184 = vsel %vm445, %v1108, 0
        %v1187 = vsel %vm445, %v1116, 0
        %v1190 = vsel %vm445, %v1124, 0
        %v1193 = vsel %vm445, %v1132, 0
        %v1196 = vsel %vm445, %v1140, 0
        %1198 = vmatprep.subr.bf16.mxu0 0
        %1199 = vmatpush1.bf16.msra.mxu0 0
        %1200 = vmatprep.subr.bf16.mxu0 0
        %1201 = vmatpush1.bf16.msra.mxu0 0
        %1202 = vmatprep.subr.bf16.mxu0 0
        %1203 = vmatpush1.bf16.msra.mxu0 0
        %1204 = vmatprep.subr.bf16.mxu0 0
        %1205 = vmatpush1.bf16.msra.mxu0 0
        %1206 = vmatprep.subr.bf16.mxu0 0
        %1207 = vmatpush1.bf16.msra.mxu0 0
        %1208 = vmatprep.subr.bf16.mxu0 0
        %1209 = vmatpush1.bf16.msra.mxu0 0
        %1210 = vmatprep.subr.bf16.mxu0 0
        %1211 = vmatpush1.bf16.msra.mxu0 0
        %1212 = vmatprep.subr.bf16.mxu0 0
        %1213 = vmatpush1.bf16.msra.mxu0 %v1145
        %1214 = vmatprep.subr.bf16.mxu0 0
        %1215 = vmatpush2.bf16.msra.mxu0 0
        %1216 = vmatprep.subr.bf16.mxu0 0
        %1217 = vmatpush2.bf16.msra.mxu0 0
        %1218 = vmatprep.subr.bf16.mxu0 0
        %1219 = vmatpush2.bf16.msra.mxu0 0
        %1220 = vmatprep.subr.bf16.mxu0 0
        %1221 = vmatpush2.bf16.msra.mxu0 0
        %1222 = vmatprep.subr.bf16.mxu0 0
        %1223 = vmatpush2.bf16.msra.mxu0 0
        %1224 = vmatprep.subr.bf16.mxu0 0
        %1225 = vmatpush2.bf16.msra.mxu0 0
        %1226 = vmatprep.subr.bf16.mxu0 0
        %1227 = vmatpush2.bf16.msra.mxu0 0
        %1228 = vmatprep.subr.bf16.mxu0 0
        %1229 = vmatpush2.bf16.msra.mxu0 0
        %1230 = vmatprep.mubr.bf16.mxu0 0
        %1231 = vmatmul.mubr.bf16.gmra.mxu0 %v1148
        %v1232 = vpop.f32.mrf.mxu0
        %v1233 = vadd.f32 0.0, %v1232
        %v1234 = vpop.f32.mrf.mxu0
        %v1235 = vpop.f32.mrf.mxu0
        %v1236 = vadd.f32 0.0, %v1235
        %v1237 = vpop.f32.mrf.mxu0
        %1238 = vmatprep.mubr.bf16.mxu0 0
        %1239 = vmatmul.mubr.bf16.gmra.mxu0 %v1151
        %v1240 = vpop.f32.mrf.mxu0
        %v1241 = vadd.f32 0.0, %v1240
        %v1242 = vpop.f32.mrf.mxu0
        %v1243 = vpop.f32.mrf.mxu0
        %v1244 = vadd.f32 0.0, %v1243
        %v1245 = vpop.f32.mrf.mxu0
        %1246 = vmatprep.mubr.bf16.mxu0 0
        %1247 = vmatmul.mubr.bf16.gmra.mxu0 %v1154
        %v1248 = vpop.f32.mrf.mxu0
        %v1249 = vadd.f32 0.0, %v1248
        %v1250 = vpop.f32.mrf.mxu0
        %v1251 = vpop.f32.mrf.mxu0
        %v1252 = vadd.f32 0.0, %v1251
        %v1253 = vpop.f32.mrf.mxu0
        %1254 = vmatprep.mubr.bf16.mxu0 0
        %1255 = vmatmul.mubr.bf16.gmra.mxu0 %v1157
        %v1256 = vpop.f32.mrf.mxu0
        %v1257 = vadd.f32 0.0, %v1256
        %v1258 = vpop.f32.mrf.mxu0
        %v1259 = vpop.f32.mrf.mxu0
        %v1260 = vadd.f32 0.0, %v1259
        %v1261 = vpop.f32.mrf.mxu0
        %1262 = vmatprep.mubr.bf16.mxu0 0
        %1263 = vmatmul.mubr.bf16.gmra.mxu0 %v1160
        %v1264 = vpop.f32.mrf.mxu0
        %v1265 = vadd.f32 0.0, %v1264
        %v1266 = vpop.f32.mrf.mxu0
        %v1267 = vpop.f32.mrf.mxu0
        %v1268 = vadd.f32 0.0, %v1267
        %v1269 = vpop.f32.mrf.mxu0
        %1270 = vmatprep.mubr.bf16.mxu0 0
        %1271 = vmatmul.mubr.bf16.gmra.mxu0 %v1163
        %v1272 = vpop.f32.mrf.mxu0
        %v1273 = vadd.f32 0.0, %v1272
        %v1274 = vpop.f32.mrf.mxu0
        %v1275 = vpop.f32.mrf.mxu0
        %v1276 = vadd.f32 0.0, %v1275
        %v1277 = vpop.f32.mrf.mxu0
        %1278 = vmatprep.mubr.bf16.mxu0 0
        %1279 = vmatmul.mubr.bf16.gmra.mxu0 %v1166
        %v1280 = vpop.f32.mrf.mxu0
        %v1281 = vadd.f32 0.0, %v1280
        %v1282 = vpop.f32.mrf.mxu0
        %v1283 = vpop.f32.mrf.mxu0
        %v1284 = vadd.f32 0.0, %v1283
        %v1285 = vpop.f32.mrf.mxu0
        %1286 = vmatprep.mubr.bf16.mxu0 0
        %1287 = vmatmul.mubr.bf16.gmra.mxu0 %v1169
        %v1288 = vpop.f32.mrf.mxu0
        %v1289 = vadd.f32 0.0, %v1288
        %v1290 = vpop.f32.mrf.mxu0
        %v1291 = vpop.f32.mrf.mxu0
        %v1292 = vadd.f32 0.0, %v1291
        %v1293 = vpop.f32.mrf.mxu0
        %1294 = vmatprep.mubr.bf16.mxu0 0
        %1295 = vmatmul.mubr.bf16.gmra.mxu0 %v1172
        %v1296 = vpop.f32.mrf.mxu0
        %v1297 = vadd.f32 0.0, %v1296
        %v1298 = vpop.f32.mrf.mxu0
        %v1299 = vpop.f32.mrf.mxu0
        %v1300 = vadd.f32 0.0, %v1299
        %v1301 = vpop.f32.mrf.mxu0
        %1302 = vmatprep.mubr.bf16.mxu0 0
        %1303 = vmatmul.mubr.bf16.gmra.mxu0 %v1175
        %v1304 = vpop.f32.mrf.mxu0
        %v1305 = vadd.f32 0.0, %v1304
        %v1306 = vpop.f32.mrf.mxu0
        %v1307 = vpop.f32.mrf.mxu0
        %v1308 = vadd.f32 0.0, %v1307
        %v1309 = vpop.f32.mrf.mxu0
        %1310 = vmatprep.mubr.bf16.mxu0 0
        %1311 = vmatmul.mubr.bf16.gmra.mxu0 %v1178
        %v1312 = vpop.f32.mrf.mxu0
        %v1313 = vadd.f32 0.0, %v1312
        %v1314 = vpop.f32.mrf.mxu0
        %v1315 = vpop.f32.mrf.mxu0
        %v1316 = vadd.f32 0.0, %v1315
        %v1317 = vpop.f32.mrf.mxu0
        %1318 = vmatprep.mubr.bf16.mxu0 0
        %1319 = vmatmul.mubr.bf16.gmra.mxu0 %v1181
        %v1320 = vpop.f32.mrf.mxu0
        %v1321 = vadd.f32 0.0, %v1320
        %v1322 = vpop.f32.mrf.mxu0
        %v1323 = vpop.f32.mrf.mxu0
        %v1324 = vadd.f32 0.0, %v1323
        %v1325 = vpop.f32.mrf.mxu0
        %1326 = vmatprep.mubr.bf16.mxu0 0
        %1327 = vmatmul.mubr.bf16.gmra.mxu0 %v1184
        %v1328 = vpop.f32.mrf.mxu0
        %v1329 = vadd.f32 0.0, %v1328
        %v1330 = vpop.f32.mrf.mxu0
        %v1331 = vpop.f32.mrf.mxu0
        %v1332 = vadd.f32 0.0, %v1331
        %v1333 = vpop.f32.mrf.mxu0
        %1334 = vmatprep.mubr.bf16.mxu0 0
        %1335 = vmatmul.mubr.bf16.gmra.mxu0 %v1187
        %v1336 = vpop.f32.mrf.mxu0
        %v1337 = vadd.f32 0.0, %v1336
        %v1338 = vpop.f32.mrf.mxu0
        %v1339 = vpop.f32.mrf.mxu0
        %v1340 = vadd.f32 0.0, %v1339
        %v1341 = vpop.f32.mrf.mxu0
        %1342 = vmatprep.mubr.bf16.mxu0 0
        %1343 = vmatmul.mubr.bf16.gmra.mxu0 %v1190
        %v1344 = vpop.f32.mrf.mxu0
        %v1345 = vadd.f32 0.0, %v1344
        %v1346 = vpop.f32.mrf.mxu0
        %v1347 = vpop.f32.mrf.mxu0
        %v1348 = vadd.f32 0.0, %v1347
        %v1349 = vpop.f32.mrf.mxu0
        %1350 = vmatprep.mubr.bf16.mxu0 0
        %1351 = vmatmul.mubr.bf16.gmra.mxu0 %v1193
        %v1352 = vpop.f32.mrf.mxu0
        %v1353 = vadd.f32 0.0, %v1352
        %v1354 = vpop.f32.mrf.mxu0
        %v1355 = vpop.f32.mrf.mxu0
        %v1356 = vadd.f32 0.0, %v1355
        %v1357 = vpop.f32.mrf.mxu0
        %1358 = vmatprep.mubr.bf16.mxu0 0
        %1359 = vmatmul.mubr.bf16.gmra.mxu0 %v1196
        %v1360 = vpop.f32.mrf.mxu0
        %v1361 = vadd.f32 0.0, %v1360
        %v1362 = vpop.f32.mrf.mxu0
        %v1363 = vpop.f32.mrf.mxu0
        %v1364 = vadd.f32 0.0, %v1363
        %v1365 = vpop.f32.mrf.mxu0
        %1366 = vdwg.mxu0
        %v1367 = vadd.f32 %v741, %v1233
        %v1368 = vadd.f32 %v744, %v1236
        %v1369 = vadd.f32 %v749, %v1241
        %v1370 = vadd.f32 %v752, %v1244
        %v1371 = vadd.f32 %v757, %v1249
        %v1372 = vadd.f32 %v760, %v1252
        %v1373 = vadd.f32 %v765, %v1257
        %v1374 = vadd.f32 %v768, %v1260
        %v1375 = vadd.f32 %v773, %v1265
        %v1376 = vadd.f32 %v776, %v1268
        %v1377 = vadd.f32 %v781, %v1273
        %v1378 = vadd.f32 %v784, %v1276
        %v1379 = vadd.f32 %v789, %v1281
        %v1380 = vadd.f32 %v792, %v1284
        %v1381 = vadd.f32 %v797, %v1289
        %v1382 = vadd.f32 %v800, %v1292
        %v1383 = vadd.f32 %v805, %v1297
        %v1384 = vadd.f32 %v808, %v1300
        %v1385 = vadd.f32 %v813, %v1305
        %v1386 = vadd.f32 %v816, %v1308
        %v1387 = vadd.f32 %v821, %v1313
        %v1388 = vadd.f32 %v824, %v1316
        %v1389 = vadd.f32 %v829, %v1321
        %v1390 = vadd.f32 %v832, %v1324
        %v1391 = vadd.f32 %v837, %v1329
        %v1392 = vadd.f32 %v840, %v1332
        %v1393 = vadd.f32 %v845, %v1337
        %v1394 = vadd.f32 %v848, %v1340
        %v1395 = vadd.f32 %v853, %v1345
        %v1396 = vadd.f32 %v856, %v1348
        %v1397 = vadd.f32 %v861, %v1353
        %v1398 = vadd.f32 %v864, %v1356
        %v1399 = vadd.f32 %v869, %v1361
        %v1400 = vadd.f32 %v872, %v1364
        %v1401 = vld [vmem:[%s168 + $0x8] sm:$0xe]
        %s1402 = scalar_lea.vmem %s1, 24
        %v1403 = vld [vmem:[%s1402] sm:$0xf]
        %v1404 = vld [vmem:[%s1402 + $0x4] sm:$0xf]
        %v1406 = vunpack.c.l.b16 %v1401
        %v1407 = vpack.c.b16 %v949, %v1406
        %vm1408 = vcmask 1046528
        %v1409 = vrot.slane %v1407, 1
        %v1410 = vrot.slane %v984, 1
        %v1411 = vsel %vm1408, %v1409, %v1410
        %v1412 = vrot.slane %v985, 1
        %v1413 = vsel %vm1408, %v1410, %v1412
        %v1414 = vrot.slane %v986, 1
        %v1415 = vsel %vm1408, %v1412, %v1414
        %v1416 = vrot.slane %v987, 1
        %v1417 = vsel %vm1408, %v1414, %v1416
        %v1418 = vrot.slane %v988, 1
        %v1419 = vsel %vm1408, %v1416, %v1418
        %v1420 = vrot.slane %v989, 1
        %v1421 = vsel %vm1408, %v1418, %v1420
        %v1422 = vrot.slane %v990, 1
        %v1423 = vsel %vm1408, %v1420, %v1422
        %v1424 = vrot.slane %v991, 1
        %v1425 = vsel %vm1408, %v1422, %v1424
        %v1426 = vrot.slane %v992, 1
        %v1427 = vsel %vm1408, %v1424, %v1426
        %v1428 = vrot.slane %v993, 1
        %v1429 = vsel %vm1408, %v1426, %v1428
        %v1430 = vrot.slane %v994, 1
        %v1431 = vsel %vm1408, %v1428, %v1430
        %v1432 = vrot.slane %v995, 1
        %v1433 = vsel %vm1408, %v1430, %v1432
        %v1434 = vrot.slane %v996, 1
        %v1435 = vsel %vm1408, %v1432, %v1434
        %v1436 = vrot.slane %v997, 1
        %v1437 = vsel %vm1408, %v1434, %v1436
        %v1438 = vrot.slane %v998, 1
        %v1439 = vsel %vm1408, %v1436, %v1438
        %v1440 = vrot.slane %v999, 1
        %v1441 = vsel %vm1408, %v1438, %v1440
        %v1442 = vrot.slane %v1000, 1
        %v1443 = vsel %vm1408, %v1440, %v1442
        %v1446 = vunpack.c.l.b16 %v1403
        %v1447 = vunpack.c.l.b16 %v1404
        %v1448 = vpack.c.b16 %v1447, %v1446
        %v1451 = vsel %vm445, %v1411, 0
        %v1454 = vsel %vm445, %v1413, 0
        %v1457 = vsel %vm445, %v1415, 0
        %v1460 = vsel %vm445, %v1417, 0
        %v1463 = vsel %vm445, %v1419, 0
        %v1466 = vsel %vm445, %v1421, 0
        %v1469 = vsel %vm445, %v1423, 0
        %v1472 = vsel %vm445, %v1425, 0
        %v1475 = vsel %vm445, %v1427, 0
        %v1478 = vsel %vm445, %v1429, 0
        %v1481 = vsel %vm445, %v1431, 0
        %v1484 = vsel %vm445, %v1433, 0
        %v1487 = vsel %vm445, %v1435, 0
        %v1490 = vsel %vm445, %v1437, 0
        %v1493 = vsel %vm445, %v1439, 0
        %v1496 = vsel %vm445, %v1441, 0
        %v1499 = vsel %vm445, %v1443, 0
        %1501 = vmatprep.subr.bf16.mxu0 0
        %1502 = vmatpush1.bf16.msra.mxu0 0
        %1503 = vmatprep.subr.bf16.mxu0 0
        %1504 = vmatpush1.bf16.msra.mxu0 0
        %1505 = vmatprep.subr.bf16.mxu0 0
        %1506 = vmatpush1.bf16.msra.mxu0 0
        %1507 = vmatprep.subr.bf16.mxu0 0
        %1508 = vmatpush1.bf16.msra.mxu0 0
        %1509 = vmatprep.subr.bf16.mxu0 0
        %1510 = vmatpush1.bf16.msra.mxu0 0
        %1511 = vmatprep.subr.bf16.mxu0 0
        %1512 = vmatpush1.bf16.msra.mxu0 0
        %1513 = vmatprep.subr.bf16.mxu0 0
        %1514 = vmatpush1.bf16.msra.mxu0 0
        %1515 = vmatprep.subr.bf16.mxu0 0
        %1516 = vmatpush1.bf16.msra.mxu0 %v1448
        %1517 = vmatprep.subr.bf16.mxu0 0
        %1518 = vmatpush2.bf16.msra.mxu0 0
        %1519 = vmatprep.subr.bf16.mxu0 0
        %1520 = vmatpush2.bf16.msra.mxu0 0
        %1521 = vmatprep.subr.bf16.mxu0 0
        %1522 = vmatpush2.bf16.msra.mxu0 0
        %1523 = vmatprep.subr.bf16.mxu0 0
        %1524 = vmatpush2.bf16.msra.mxu0 0
        %1525 = vmatprep.subr.bf16.mxu0 0
        %1526 = vmatpush2.bf16.msra.mxu0 0
        %1527 = vmatprep.subr.bf16.mxu0 0
        %1528 = vmatpush2.bf16.msra.mxu0 0
        %1529 = vmatprep.subr.bf16.mxu0 0
        %1530 = vmatpush2.bf16.msra.mxu0 0
        %1531 = vmatprep.subr.bf16.mxu0 0
        %1532 = vmatpush2.bf16.msra.mxu0 0
        %1533 = vmatprep.mubr.bf16.mxu0 0
        %1534 = vmatmul.mubr.bf16.gmra.mxu0 %v1451
        %v1535 = vpop.f32.mrf.mxu0
        %v1536 = vadd.f32 0.0, %v1535
        %v1537 = vpop.f32.mrf.mxu0
        %v1538 = vpop.f32.mrf.mxu0
        %v1539 = vadd.f32 0.0, %v1538
        %v1540 = vpop.f32.mrf.mxu0
        %1541 = vmatprep.mubr.bf16.mxu0 0
        %1542 = vmatmul.mubr.bf16.gmra.mxu0 %v1454
        %v1543 = vpop.f32.mrf.mxu0
        %v1544 = vadd.f32 0.0, %v1543
        %v1545 = vpop.f32.mrf.mxu0
        %v1546 = vpop.f32.mrf.mxu0
        %v1547 = vadd.f32 0.0, %v1546
        %v1548 = vpop.f32.mrf.mxu0
        %1549 = vmatprep.mubr.bf16.mxu0 0
        %1550 = vmatmul.mubr.bf16.gmra.mxu0 %v1457
        %v1551 = vpop.f32.mrf.mxu0
        %v1552 = vadd.f32 0.0, %v1551
        %v1553 = vpop.f32.mrf.mxu0
        %v1554 = vpop.f32.mrf.mxu0
        %v1555 = vadd.f32 0.0, %v1554
        %v1556 = vpop.f32.mrf.mxu0
        %1557 = vmatprep.mubr.bf16.mxu0 0
        %1558 = vmatmul.mubr.bf16.gmra.mxu0 %v1460
        %v1559 = vpop.f32.mrf.mxu0
        %v1560 = vadd.f32 0.0, %v1559
        %v1561 = vpop.f32.mrf.mxu0
        %v1562 = vpop.f32.mrf.mxu0
        %v1563 = vadd.f32 0.0, %v1562
        %v1564 = vpop.f32.mrf.mxu0
        %1565 = vmatprep.mubr.bf16.mxu0 0
        %1566 = vmatmul.mubr.bf16.gmra.mxu0 %v1463
        %v1567 = vpop.f32.mrf.mxu0
        %v1568 = vadd.f32 0.0, %v1567
        %v1569 = vpop.f32.mrf.mxu0
        %v1570 = vpop.f32.mrf.mxu0
        %v1571 = vadd.f32 0.0, %v1570
        %v1572 = vpop.f32.mrf.mxu0
        %1573 = vmatprep.mubr.bf16.mxu0 0
        %1574 = vmatmul.mubr.bf16.gmra.mxu0 %v1466
        %v1575 = vpop.f32.mrf.mxu0
        %v1576 = vadd.f32 0.0, %v1575
        %v1577 = vpop.f32.mrf.mxu0
        %v1578 = vpop.f32.mrf.mxu0
        %v1579 = vadd.f32 0.0, %v1578
        %v1580 = vpop.f32.mrf.mxu0
        %1581 = vmatprep.mubr.bf16.mxu0 0
        %1582 = vmatmul.mubr.bf16.gmra.mxu0 %v1469
        %v1583 = vpop.f32.mrf.mxu0
        %v1584 = vadd.f32 0.0, %v1583
        %v1585 = vpop.f32.mrf.mxu0
        %v1586 = vpop.f32.mrf.mxu0
        %v1587 = vadd.f32 0.0, %v1586
        %v1588 = vpop.f32.mrf.mxu0
        %1589 = vmatprep.mubr.bf16.mxu0 0
        %1590 = vmatmul.mubr.bf16.gmra.mxu0 %v1472
        %v1591 = vpop.f32.mrf.mxu0
        %v1592 = vadd.f32 0.0, %v1591
        %v1593 = vpop.f32.mrf.mxu0
        %v1594 = vpop.f32.mrf.mxu0
        %v1595 = vadd.f32 0.0, %v1594
        %v1596 = vpop.f32.mrf.mxu0
        %1597 = vmatprep.mubr.bf16.mxu0 0
        %1598 = vmatmul.mubr.bf16.gmra.mxu0 %v1475
        %v1599 = vpop.f32.mrf.mxu0
        %v1600 = vadd.f32 0.0, %v1599
        %v1601 = vpop.f32.mrf.mxu0
        %v1602 = vpop.f32.mrf.mxu0
        %v1603 = vadd.f32 0.0, %v1602
        %v1604 = vpop.f32.mrf.mxu0
        %1605 = vmatprep.mubr.bf16.mxu0 0
        %1606 = vmatmul.mubr.bf16.gmra.mxu0 %v1478
        %v1607 = vpop.f32.mrf.mxu0
        %v1608 = vadd.f32 0.0, %v1607
        %v1609 = vpop.f32.mrf.mxu0
        %v1610 = vpop.f32.mrf.mxu0
        %v1611 = vadd.f32 0.0, %v1610
        %v1612 = vpop.f32.mrf.mxu0
        %1613 = vmatprep.mubr.bf16.mxu0 0
        %1614 = vmatmul.mubr.bf16.gmra.mxu0 %v1481
        %v1615 = vpop.f32.mrf.mxu0
        %v1616 = vadd.f32 0.0, %v1615
        %v1617 = vpop.f32.mrf.mxu0
        %v1618 = vpop.f32.mrf.mxu0
        %v1619 = vadd.f32 0.0, %v1618
        %v1620 = vpop.f32.mrf.mxu0
        %1621 = vmatprep.mubr.bf16.mxu0 0
        %1622 = vmatmul.mubr.bf16.gmra.mxu0 %v1484
        %v1623 = vpop.f32.mrf.mxu0
        %v1624 = vadd.f32 0.0, %v1623
        %v1625 = vpop.f32.mrf.mxu0
        %v1626 = vpop.f32.mrf.mxu0
        %v1627 = vadd.f32 0.0, %v1626
        %v1628 = vpop.f32.mrf.mxu0
        %1629 = vmatprep.mubr.bf16.mxu0 0
        %1630 = vmatmul.mubr.bf16.gmra.mxu0 %v1487
        %v1631 = vpop.f32.mrf.mxu0
        %v1632 = vadd.f32 0.0, %v1631
        %v1633 = vpop.f32.mrf.mxu0
        %v1634 = vpop.f32.mrf.mxu0
        %v1635 = vadd.f32 0.0, %v1634
        %v1636 = vpop.f32.mrf.mxu0
        %1637 = vmatprep.mubr.bf16.mxu0 0
        %1638 = vmatmul.mubr.bf16.gmra.mxu0 %v1490
        %v1639 = vpop.f32.mrf.mxu0
        %v1640 = vadd.f32 0.0, %v1639
        %v1641 = vpop.f32.mrf.mxu0
        %v1642 = vpop.f32.mrf.mxu0
        %v1643 = vadd.f32 0.0, %v1642
        %v1644 = vpop.f32.mrf.mxu0
        %1645 = vmatprep.mubr.bf16.mxu0 0
        %1646 = vmatmul.mubr.bf16.gmra.mxu0 %v1493
        %v1647 = vpop.f32.mrf.mxu0
        %v1648 = vadd.f32 0.0, %v1647
        %v1649 = vpop.f32.mrf.mxu0
        %v1650 = vpop.f32.mrf.mxu0
        %v1651 = vadd.f32 0.0, %v1650
        %v1652 = vpop.f32.mrf.mxu0
        %1653 = vmatprep.mubr.bf16.mxu0 0
        %1654 = vmatmul.mubr.bf16.gmra.mxu0 %v1496
        %v1655 = vpop.f32.mrf.mxu0
        %v1656 = vadd.f32 0.0, %v1655
        %v1657 = vpop.f32.mrf.mxu0
        %v1658 = vpop.f32.mrf.mxu0
        %v1659 = vadd.f32 0.0, %v1658
        %v1660 = vpop.f32.mrf.mxu0
        %1661 = vmatprep.mubr.bf16.mxu0 0
        %1662 = vmatmul.mubr.bf16.gmra.mxu0 %v1499
        %v1663 = vpop.f32.mrf.mxu0
        %v1664 = vadd.f32 0.0, %v1663
        %v1665 = vpop.f32.mrf.mxu0
        %v1666 = vpop.f32.mrf.mxu0
        %v1667 = vadd.f32 0.0, %v1666
        %v1668 = vpop.f32.mrf.mxu0
        %1669 = vdwg.mxu0
        %v1670 = vadd.f32 %v1367, %v1536
        %v1671 = vadd.f32 %v1368, %v1539
        %v1672 = vadd.f32 %v1369, %v1544
        %v1673 = vadd.f32 %v1370, %v1547
        %v1674 = vadd.f32 %v1371, %v1552
        %v1675 = vadd.f32 %v1372, %v1555
        %v1676 = vadd.f32 %v1373, %v1560
        %v1677 = vadd.f32 %v1374, %v1563
        %v1678 = vadd.f32 %v1375, %v1568
        %v1679 = vadd.f32 %v1376, %v1571
        %v1680 = vadd.f32 %v1377, %v1576
        %v1681 = vadd.f32 %v1378, %v1579
        %v1682 = vadd.f32 %v1379, %v1584
        %v1683 = vadd.f32 %v1380, %v1587
        %v1684 = vadd.f32 %v1381, %v1592
        %v1685 = vadd.f32 %v1382, %v1595
        %v1686 = vadd.f32 %v1383, %v1600
        %v1687 = vadd.f32 %v1384, %v1603
        %v1688 = vadd.f32 %v1385, %v1608
        %v1689 = vadd.f32 %v1386, %v1611
        %v1690 = vadd.f32 %v1387, %v1616
        %v1691 = vadd.f32 %v1388, %v1619
        %v1692 = vadd.f32 %v1389, %v1624
        %v1693 = vadd.f32 %v1390, %v1627
        %v1694 = vadd.f32 %v1391, %v1632
        %v1695 = vadd.f32 %v1392, %v1635
        %v1696 = vadd.f32 %v1393, %v1640
        %v1697 = vadd.f32 %v1394, %v1643
        %v1698 = vadd.f32 %v1395, %v1648
        %v1699 = vadd.f32 %v1396, %v1651
        %v1700 = vadd.f32 %v1397, %v1656
        %v1701 = vadd.f32 %v1398, %v1659
        %v1702 = vadd.f32 %v1399, %v1664
        %v1703 = vadd.f32 %v1400, %v1667
        %v1704 = vld [vmem:[%s2] sm:$0x1]
        %v1706 = vlaneseq
        %v1707 = vshrl.u32 %v1706, 7
        %v1708 = vsub.s32 0, %v1707
        %v1709 = vrot.slane %v1704, %v1708
        %v1711 = vadd.f32 %v1670, %v1709
        %v1712 = vadd.f32 %v1671, %v1709
        %v1713 = vadd.f32 %v1672, %v1709
        %v1714 = vadd.f32 %v1673, %v1709
        %v1715 = vadd.f32 %v1674, %v1709
        %v1716 = vadd.f32 %v1675, %v1709
        %v1717 = vadd.f32 %v1676, %v1709
        %v1718 = vadd.f32 %v1677, %v1709
        %v1719 = vadd.f32 %v1678, %v1709
        %v1720 = vadd.f32 %v1679, %v1709
        %v1721 = vadd.f32 %v1680, %v1709
        %v1722 = vadd.f32 %v1681, %v1709
        %v1723 = vadd.f32 %v1682, %v1709
        %v1724 = vadd.f32 %v1683, %v1709
        %v1725 = vadd.f32 %v1684, %v1709
        %v1726 = vadd.f32 %v1685, %v1709
        %v1727 = vadd.f32 %v1686, %v1709
        %v1728 = vadd.f32 %v1687, %v1709
        %v1729 = vadd.f32 %v1688, %v1709
        %v1730 = vadd.f32 %v1689, %v1709
        %v1731 = vadd.f32 %v1690, %v1709
        %v1732 = vadd.f32 %v1691, %v1709
        %v1733 = vadd.f32 %v1692, %v1709
        %v1734 = vadd.f32 %v1693, %v1709
        %v1735 = vadd.f32 %v1694, %v1709
        %v1736 = vadd.f32 %v1695, %v1709
        %v1737 = vadd.f32 %v1696, %v1709
        %v1738 = vadd.f32 %v1697, %v1709
        %v1739 = vadd.f32 %v1698, %v1709
        %v1740 = vadd.f32 %v1699, %v1709
        %v1741 = vadd.f32 %v1700, %v1709
        %v1742 = vadd.f32 %v1701, %v1709
        %v1743 = vadd.f32 %v1702, %v1709
        %v1744 = vadd.f32 %v1703, %v1709
        %vm1745 = vcmp.ge.f32.partialorder %v1711, 0.0
        %vm1746 = vcmp.ge.f32.partialorder %v1712, 0.0
        %vm1747 = vcmp.ge.f32.partialorder %v1713, 0.0
        %vm1748 = vcmp.ge.f32.partialorder %v1714, 0.0
        %vm1749 = vcmp.ge.f32.partialorder %v1715, 0.0
        %vm1750 = vcmp.ge.f32.partialorder %v1716, 0.0
        %vm1751 = vcmp.ge.f32.partialorder %v1717, 0.0
        %vm1752 = vcmp.ge.f32.partialorder %v1718, 0.0
        %vm1753 = vcmp.ge.f32.partialorder %v1719, 0.0
        %vm1754 = vcmp.ge.f32.partialorder %v1720, 0.0
        %vm1755 = vcmp.ge.f32.partialorder %v1721, 0.0
        %vm1756 = vcmp.ge.f32.partialorder %v1722, 0.0
        %vm1757 = vcmp.ge.f32.partialorder %v1723, 0.0
        %vm1758 = vcmp.ge.f32.partialorder %v1724, 0.0
        %vm1759 = vcmp.ge.f32.partialorder %v1725, 0.0
        %vm1760 = vcmp.ge.f32.partialorder %v1726, 0.0
        %vm1761 = vcmp.ge.f32.partialorder %v1727, 0.0
        %vm1762 = vcmp.ge.f32.partialorder %v1728, 0.0
        %vm1763 = vcmp.ge.f32.partialorder %v1729, 0.0
        %vm1764 = vcmp.ge.f32.partialorder %v1730, 0.0
        %vm1765 = vcmp.ge.f32.partialorder %v1731, 0.0
        %vm1766 = vcmp.ge.f32.partialorder %v1732, 0.0
        %vm1767 = vcmp.ge.f32.partialorder %v1733, 0.0
        %vm1768 = vcmp.ge.f32.partialorder %v1734, 0.0
        %vm1769 = vcmp.ge.f32.partialorder %v1735, 0.0
        %vm1770 = vcmp.ge.f32.partialorder %v1736, 0.0
        %vm1771 = vcmp.ge.f32.partialorder %v1737, 0.0
        %vm1772 = vcmp.ge.f32.partialorder %v1738, 0.0
        %vm1773 = vcmp.ge.f32.partialorder %v1739, 0.0
        %vm1774 = vcmp.ge.f32.partialorder %v1740, 0.0
        %vm1775 = vcmp.ge.f32.partialorder %v1741, 0.0
        %vm1776 = vcmp.ge.f32.partialorder %v1742, 0.0
        %vm1777 = vcmp.ge.f32.partialorder %v1743, 0.0
        %vm1778 = vcmp.ge.f32.partialorder %v1744, 0.0
        %v1779 = vmul.f32 %v1711, 0.2
        %v1780 = vmul.f32 %v1712, 0.2
        %v1781 = vmul.f32 %v1713, 0.2
        %v1782 = vmul.f32 %v1714, 0.2
        %v1783 = vmul.f32 %v1715, 0.2
        %v1784 = vmul.f32 %v1716, 0.2
        %v1785 = vmul.f32 %v1717, 0.2
        %v1786 = vmul.f32 %v1718, 0.2
        %v1787 = vmul.f32 %v1719, 0.2
        %v1788 = vmul.f32 %v1720, 0.2
        %v1789 = vmul.f32 %v1721, 0.2
        %v1790 = vmul.f32 %v1722, 0.2
        %v1791 = vmul.f32 %v1723, 0.2
        %v1792 = vmul.f32 %v1724, 0.2
        %v1793 = vmul.f32 %v1725, 0.2
        %v1794 = vmul.f32 %v1726, 0.2
        %v1795 = vmul.f32 %v1727, 0.2
        %v1796 = vmul.f32 %v1728, 0.2
        %v1797 = vmul.f32 %v1729, 0.2
        %v1798 = vmul.f32 %v1730, 0.2
        %v1799 = vmul.f32 %v1731, 0.2
        %v1800 = vmul.f32 %v1732, 0.2
        %v1801 = vmul.f32 %v1733, 0.2
        %v1802 = vmul.f32 %v1734, 0.2
        %v1803 = vmul.f32 %v1735, 0.2
        %v1804 = vmul.f32 %v1736, 0.2
        %v1805 = vmul.f32 %v1737, 0.2
        %v1806 = vmul.f32 %v1738, 0.2
        %v1807 = vmul.f32 %v1739, 0.2
        %v1808 = vmul.f32 %v1740, 0.2
        %v1809 = vmul.f32 %v1741, 0.2
        %v1810 = vmul.f32 %v1742, 0.2
        %v1811 = vmul.f32 %v1743, 0.2
        %v1812 = vmul.f32 %v1744, 0.2
        %v1813 = vsel %vm1745, %v1711, %v1779
        %v1814 = vsel %vm1746, %v1712, %v1780
        %v1815 = vsel %vm1747, %v1713, %v1781
        %v1816 = vsel %vm1748, %v1714, %v1782
        %v1817 = vsel %vm1749, %v1715, %v1783
        %v1818 = vsel %vm1750, %v1716, %v1784
        %v1819 = vsel %vm1751, %v1717, %v1785
        %v1820 = vsel %vm1752, %v1718, %v1786
        %v1821 = vsel %vm1753, %v1719, %v1787
        %v1822 = vsel %vm1754, %v1720, %v1788
        %v1823 = vsel %vm1755, %v1721, %v1789
        %v1824 = vsel %vm1756, %v1722, %v1790
        %v1825 = vsel %vm1757, %v1723, %v1791
        %v1826 = vsel %vm1758, %v1724, %v1792
        %v1827 = vsel %vm1759, %v1725, %v1793
        %v1828 = vsel %vm1760, %v1726, %v1794
        %v1829 = vsel %vm1761, %v1727, %v1795
        %v1830 = vsel %vm1762, %v1728, %v1796
        %v1831 = vsel %vm1763, %v1729, %v1797
        %v1832 = vsel %vm1764, %v1730, %v1798
        %v1833 = vsel %vm1765, %v1731, %v1799
        %v1834 = vsel %vm1766, %v1732, %v1800
        %v1835 = vsel %vm1767, %v1733, %v1801
        %v1836 = vsel %vm1768, %v1734, %v1802
        %v1837 = vsel %vm1769, %v1735, %v1803
        %v1838 = vsel %vm1770, %v1736, %v1804
        %v1839 = vsel %vm1771, %v1737, %v1805
        %v1840 = vsel %vm1772, %v1738, %v1806
        %v1841 = vsel %vm1773, %v1739, %v1807
        %v1842 = vsel %vm1774, %v1740, %v1808
        %v1843 = vsel %vm1775, %v1741, %v1809
        %v1844 = vsel %vm1776, %v1742, %v1810
        %v1845 = vsel %vm1777, %v1743, %v1811
        %v1846 = vsel %vm1778, %v1744, %v1812
        %v1847 = vpack.c.bf16 %v1814, %v1813
        %v1848 = vpack.c.bf16 %v1816, %v1815
        %v1849 = vpack.c.bf16 %v1818, %v1817
        %v1850 = vpack.c.bf16 %v1820, %v1819
        %v1851 = vpack.c.bf16 %v1822, %v1821
        %v1852 = vpack.c.bf16 %v1824, %v1823
        %v1853 = vpack.c.bf16 %v1826, %v1825
        %v1854 = vpack.c.bf16 %v1828, %v1827
        %v1855 = vpack.c.bf16 %v1830, %v1829
        %v1856 = vpack.c.bf16 %v1832, %v1831
        %v1857 = vpack.c.bf16 %v1834, %v1833
        %v1858 = vpack.c.bf16 %v1836, %v1835
        %v1859 = vpack.c.bf16 %v1838, %v1837
        %v1860 = vpack.c.bf16 %v1840, %v1839
        %v1861 = vpack.c.bf16 %v1842, %v1841
        %v1862 = vpack.c.bf16 %v1844, %v1843
        %v1863 = vpack.c.bf16 %v1846, %v1845
        %v1881 = vunpack.c.l.b16 %v1847
        %v1882 = vunpack.c.h.b16 %v1847
        %v1883 = vunpack.c.l.b16 %v1848
        %v1884 = vunpack.c.h.b16 %v1848
        %v1885 = vunpack.c.l.b16 %v1849
        %v1886 = vunpack.c.h.b16 %v1849
        %v1887 = vunpack.c.l.b16 %v1850
        %v1888 = vunpack.c.h.b16 %v1850
        %v1889 = vunpack.c.l.b16 %v1851
        %v1890 = vunpack.c.h.b16 %v1851
        %v1891 = vunpack.c.l.b16 %v1852
        %v1892 = vunpack.c.h.b16 %v1852
        %v1893 = vunpack.c.l.b16 %v1853
        %v1894 = vunpack.c.h.b16 %v1853
        %v1895 = vunpack.c.l.b16 %v1854
        %v1896 = vunpack.c.h.b16 %v1854
        %v1897 = vunpack.c.l.b16 %v1855
        %v1898 = vunpack.c.h.b16 %v1855
        %v1899 = vunpack.c.l.b16 %v1856
        %v1900 = vunpack.c.h.b16 %v1856
        %v1901 = vunpack.c.l.b16 %v1857
        %v1902 = vunpack.c.h.b16 %v1857
        %v1903 = vunpack.c.l.b16 %v1858
        %v1904 = vunpack.c.h.b16 %v1858
        %v1905 = vunpack.c.l.b16 %v1859
        %v1906 = vunpack.c.h.b16 %v1859
        %v1907 = vunpack.c.l.b16 %v1860
        %v1908 = vunpack.c.h.b16 %v1860
        %v1909 = vunpack.c.l.b16 %v1861
        %v1910 = vunpack.c.h.b16 %v1861
        %v1911 = vunpack.c.l.b16 %v1862
        %v1912 = vunpack.c.h.b16 %v1862
        %v1913 = vunpack.c.l.b16 %v1863
        %v1914 = vunpack.c.h.b16 %v1863
        %v1915 = vpack.c.b16 %v1881, %v1881
        %v1916 = vpack.c.b16 %v1882, %v1882
        %v1917 = vpack.c.b16 %v1883, %v1883
        %v1918 = vpack.c.b16 %v1884, %v1884
        %v1919 = vpack.c.b16 %v1885, %v1885
        %v1920 = vpack.c.b16 %v1886, %v1886
        %v1921 = vpack.c.b16 %v1887, %v1887
        %v1922 = vpack.c.b16 %v1888, %v1888
        %v1923 = vpack.c.b16 %v1889, %v1889
        %v1924 = vpack.c.b16 %v1890, %v1890
        %v1925 = vpack.c.b16 %v1891, %v1891
        %v1926 = vpack.c.b16 %v1892, %v1892
        %v1927 = vpack.c.b16 %v1893, %v1893
        %v1928 = vpack.c.b16 %v1894, %v1894
        %v1929 = vpack.c.b16 %v1895, %v1895
        %v1930 = vpack.c.b16 %v1896, %v1896
        %v1931 = vpack.c.b16 %v1897, %v1897
        %v1932 = vpack.c.b16 %v1898, %v1898
        %v1933 = vpack.c.b16 %v1899, %v1899
        %v1934 = vpack.c.b16 %v1900, %v1900
        %v1935 = vpack.c.b16 %v1901, %v1901
        %v1936 = vpack.c.b16 %v1902, %v1902
        %v1937 = vpack.c.b16 %v1903, %v1903
        %v1938 = vpack.c.b16 %v1904, %v1904
        %v1939 = vpack.c.b16 %v1905, %v1905
        %v1940 = vpack.c.b16 %v1906, %v1906
        %v1941 = vpack.c.b16 %v1907, %v1907
        %v1942 = vpack.c.b16 %v1908, %v1908
        %v1943 = vpack.c.b16 %v1909, %v1909
        %v1944 = vpack.c.b16 %v1910, %v1910
        %v1945 = vpack.c.b16 %v1911, %v1911
        %v1946 = vpack.c.b16 %v1912, %v1912
        %v1947 = vpack.c.b16 %v1913, %v1913
        %v1948 = vpack.c.b16 %v1914, %v1914
        %1983 = vst [vmem:[%s163] sm:$0xf] %v1915
        %1984 = vst [vmem:[%s163 + $0x4] sm:$0xf] %v1916
        %1985 = vst [vmem:[%s163 + $0x8] sm:$0xf] %v1917
        %1986 = vst [vmem:[%s163 + $0xc] sm:$0xf] %v1918
        %1987 = vst [vmem:[%s163 + $0x10] sm:$0xf] %v1919
        %1988 = vst [vmem:[%s163 + $0x14] sm:$0xf] %v1920
        %1989 = vst [vmem:[%s163 + $0x18] sm:$0xf] %v1921
        %1990 = vst [vmem:[%s163 + $0x1c] sm:$0xf] %v1922
        %1991 = vst [vmem:[%s163 + $0x20] sm:$0xf] %v1923
        %1992 = vst [vmem:[%s163 + $0x24] sm:$0xf] %v1924
        %1993 = vst [vmem:[%s163 + $0x28] sm:$0xf] %v1925
        %1994 = vst [vmem:[%s163 + $0x2c] sm:$0xf] %v1926
        %1995 = vst [vmem:[%s163 + $0x30] sm:$0xf] %v1927
        %1996 = vst [vmem:[%s163 + $0x34] sm:$0xf] %v1928
        %1997 = vst [vmem:[%s163 + $0x38] sm:$0xf] %v1929
        %1998 = vst [vmem:[%s163 + $0x3c] sm:$0xf] %v1930
        %1999 = vst [vmem:[%s163 + $0x40] sm:$0xf] %v1931
        %2000 = vst [vmem:[%s163 + $0x44] sm:$0xf] %v1932
        %2001 = vst [vmem:[%s163 + $0x48] sm:$0xf] %v1933
        %2002 = vst [vmem:[%s163 + $0x4c] sm:$0xf] %v1934
        %2003 = vst [vmem:[%s163 + $0x50] sm:$0xf] %v1935
        %2004 = vst [vmem:[%s163 + $0x54] sm:$0xf] %v1936
        %2005 = vst [vmem:[%s163 + $0x58] sm:$0xf] %v1937
        %2006 = vst [vmem:[%s163 + $0x5c] sm:$0xf] %v1938
        %2007 = vst [vmem:[%s163 + $0x60] sm:$0xf] %v1939
        %2008 = vst [vmem:[%s163 + $0x64] sm:$0xf] %v1940
        %2009 = vst [vmem:[%s163 + $0x68] sm:$0xf] %v1941
        %2010 = vst [vmem:[%s163 + $0x6c] sm:$0xf] %v1942
        %2011 = vst [vmem:[%s163 + $0x70] sm:$0xf] %v1943
        %2012 = vst [vmem:[%s163 + $0x74] sm:$0xf] %v1944
        %2013 = vst [vmem:[%s163 + $0x78] sm:$0xf] %v1945
        %2014 = vst [vmem:[%s163 + $0x7c] sm:$0xf] %v1946
        %2015 = vst [vmem:[%s163 + $0x80] sm:$0xf] %v1947
        %2016 = vst [vmem:[%s163 + $0x84] sm:$0xf] %v1948
        %s2017 = sand.u32 %s93, 1
        %s2018 = scalar_lea.sflag [#allocation3], %s2017
        %s2019 = sand.u32 %s93, 1
        %s2020 = smul.addr %s2019, 136
        %s2021 = scalar_lea.vmem [#allocation2], %s2020
        // Predicated region
        $region33: #{tpu_custom_call.1} parent=31 // pred_check
          %p2022 = pneg %p103
        $region34: #{tpu_custom_call.1} parent=31 // pred_check_branch
          %2024 = sbr.rel (%p2022) target = $region36
        $region35: #{tpu_custom_call.1} parent=31 // pred_region
          %s2026 = ssub.s32 2176, 2176
          %2027 = vsyncadd %s2018, %s2026
          %s2028 = smul.addr %s17, 34
          %s2029 = smul.addr %s2028, 64
          %s2030 = scalar_lea.hbm %s3, %s2029
          %s2031 = sshll.u32 %s2021, 4
          %s2032 = int_to_ptr.vmem [resolvable:$true] %s2031
          %2037 = dma.vmem_to_hbm [thread:$0]  %s2032, 2176, %s2030, %s2018, 64, 64, 4
        $region36: #{tpu_custom_call.1} parent=31 // pred_fallthru
          _
      $region32: #{tpu_custom_call.1} parent=5 // pred_fallthru
        _
      %p2038 = scmp.le.s32.totalorder 2, %s12
      // Predicated region
      $region37: #{tpu_custom_call.1} parent=5 // pred_check
        %p2039 = pneg %p2038
      $region38: #{tpu_custom_call.1} parent=5 // pred_check_branch
        %2041 = sbr.rel (%p2039) target = $region40
      $region39: #{tpu_custom_call.1} parent=5 // pred_region
        %s2042 = ssub.s32 %s12, 2
        // Predicated region
        $region41: #{tpu_custom_call.1} parent=39 // pred_check
          %p2043 = pneg %p109
        $region42: #{tpu_custom_call.1} parent=39 // pred_check_branch
          %2045 = sbr.rel (%p2043) target = $region44
        $region43: #{tpu_custom_call.1} parent=39 // pred_region
          %s2046 = sand.u32 %s94, 1
          %s2047 = scalar_lea.sflag [#allocation3], %s2046
          %s2048 = sand.u32 %s94, 1
          %s2049 = smul.addr %s2048, 136
          %s2050 = scalar_lea.vmem [#allocation2], %s2049
          %2051 = dma.done %s2047, 2176
        $region44: #{tpu_custom_call.1} parent=39 // pred_fallthru
          _
      $region40: #{tpu_custom_call.1} parent=5 // pred_fallthru
        _
    $region6: #{tpu_custom_call.1} parent=1 // loop_footer
      %s16 = sadd.s32 1, %s12
    $region7: #{tpu_custom_call.1} parent=1 // loop_footer_branch
      %11 = sbr.rel target = $region3
    $region8: #{tpu_custom_call.1} parent=1 // loop_exit
      _
    %2052 = vsyncpa [#allocation3], 1
    %s2053 = scalar_lea.sflag [#allocation3], 1
    %2054 = vsyncpa %s2053, 1

</llo_original>
